<compile_context>
chip_gen: v7x
topology: tpu7x:2x2x1
jax: 0.10.0
libtpu: 0.0.40
codegen_flags: <defaults>
</compile_context>

<pallas_src>
import functools

import jax
import jax.numpy as jnp
from jax.experimental import pallas as pl
from jax.experimental.pallas import tpu as pltpu


# ------------------------------ fused Pallas kernel ------------------------------


def make_fused_kernel(B, H, W, C, Cb, G, GUARD):
    HW = H * W
    inv_hw = 1.0 / float(HW)

    def kernel(x_ref, sc1c_ref, sh1c_ref, sc1r_ref, sh1r_ref, wd_ref, wu_ref,
               w1s_ref, sh2_ref, w2f_ref, cm_ref, o_ref, hp_ref):
        # Zero the guard lanes of the padded conv2 slab.  Done every step (cheap:
        # two (B, Cb, GUARD) stores) instead of once at program_id == 0, so the kernel
        # stays correct when the "parallel" grid axis is split across v7x's 2 TCs
        # (a core that never executes step 0 would otherwise see garbage guards).
        zg = jnp.zeros((B, Cb, GUARD), jnp.float32)
        hp_ref[:, :, 0:GUARD] = zg
        hp_ref[:, :, GUARD + HW:GUARD + HW + GUARD] = zg

        # ---- SE branch for the whole B-sample block (lane-oriented (B, C) vectors) ----
        # mean(BN1(x)) == BN1_affine(mean(x)), so pool the raw input block directly.
        xmean = jnp.sum(x_ref[...], axis=2) * inv_hw                    # (B, C)
        pooled = xmean * sc1r_ref[...] + sh1r_ref[...]                  # (B, C)
        z = jnp.maximum(
            jnp.sum(pooled[:, None, :] * wd_ref[...], axis=2), 0.0)     # (B, C16)
        u = jnp.sum(z[:, None, :] * wu_ref[...], axis=2)                # (B, C)
        gate = 1.0 / (1.0 + jnp.exp(-u))                                # sigmoid, (B, C)

        # Lane-dense row-wrap masks for the horizontally shifted conv2 taps.
        not_first = cm_ref[0:1, :]                                      # 0 where x == 0
        not_last = cm_ref[1:2, :]                                       # 0 where x == W-1

        for b in range(B):                       # B is small and static (unrolled)
            # ---- BN1 + ReLU on one (C, HW) sample: full lane occupancy ----
            a = jnp.maximum(x_ref[b] * sc1c_ref[...] + sh1c_ref[...], 0.0)   # (C, HW)

            # ---- conv1 (1x1) with SE gate + BN2 scale folded into the weights,
            #      BN2 shift as bias, then ReLU ----
            w1g = w1s_ref[...] * gate[b:b + 1, :]                       # (Cb, C)
            h = jnp.maximum(
                jnp.dot(w1g, a, preferred_element_type=jnp.float32)
                + sh2_ref[...], 0.0)                                    # (Cb, HW)

            # ---- conv2 (3x3, pad=1): one K = 9*Cb MXU contraction per sample ----
            hp_ref[b, :, GUARD:GUARD + HW] = h
            pieces = []
            for ky in range(3):
                for kx in range(3):
                    off = GUARD + (ky - 1) * W + (kx - 1)
                    p = hp_ref[b, :, off:off + HW]                      # (Cb, HW)
                    if kx == 0:                  # reads x-1: invalid at x == 0
                        p = p * not_first
                    elif kx == 2:                # reads x+1: invalid at x == W-1
                        p = p * not_last
                    pieces.append(p)
            slab = jnp.concatenate(pieces, axis=0)                      # (9*Cb, HW)
            o_ref[b] = jnp.dot(w2f_ref[...], slab,
                               preferred_element_type=jnp.float32)      # (G, HW)

    return kernel


# ---------------------------------- wrapper ----------------------------------


def se_dense_layer_forward(x_nchw, params, drop_rate=0.0):
    """Forward pass of _SeDenseLayer. Input/output are NCHW like PyTorch."""
    assert drop_rate == 0.0  # TODO(synk): dropout (training mode) not implemented
    eps = 1e-5
    N, C, H, W = x_nchw.shape
    HW = H * W
    Cb = params["w1"].shape[0]       # bn_size * growth_rate
    G = params["w2"].shape[0]        # growth_rate
    C16 = params["wd"].shape[0]      # C // 16
    GUARD = max(32, W + 1)           # zero guard lanes on each side of the conv2 slab

    # Batch B samples per grid step to amortize the per-step pipeline overhead while
    # keeping >= 2 grid steps (v7x has 2 TensorCores); cap B to stay small in VMEM.
    B = min(8, max(1, N // 2)) if N >= 2 else 1
    steps = -(-N // B)
    Npad = steps * B

    # ---- fold BN statistics / SE weights into kernel-friendly shapes (tiny, one-off) ----
    sc1 = params["gamma1"] / jnp.sqrt(params["var1"] + eps)
    sh1 = params["beta1"] - params["mean1"] * sc1
    sc2 = params["gamma2"] / jnp.sqrt(params["var2"] + eps)
    sh2 = params["beta2"] - params["mean2"] * sc2

    sc1c = sc1.reshape(C, 1)                                    # per-channel (sublane)
    sh1c = sh1.reshape(C, 1)
    sc1r = sc1.reshape(1, C)                                    # per-channel (lane, SE path)
    sh1r = sh1.reshape(1, C)
    wd = params["wd"].reshape(C16, C)                           # SE down
    wu = params["wu"].reshape(C, C16)                           # SE up
    w1s = params["w1"].reshape(Cb, C) * sc2[:, None]            # conv1 with BN2 scale folded
    sh2c = sh2.reshape(Cb, 1)                                   # BN2 shift as conv1 bias
    w2f = jnp.transpose(params["w2"], (0, 2, 3, 1)).reshape(G, 9 * Cb)  # (g, ky, kx, c)

    # lane-dense row-wrap masks for the 6 horizontally shifted conv2 taps
    xs = jnp.arange(HW, dtype=jnp.int32) % W
    cmask = jnp.stack([xs != 0, xs != (W - 1)], axis=0).astype(jnp.float32)  # (2, HW)

    # NCHW -> (N, C, HW) is a free reshape (channels-first layout, no transpose / HBM pass)
    x_f = x_nchw.reshape(N, C, HW).astype(jnp.float32)
    if Npad != N:
        x_f = jnp.concatenate(
            [x_f, jnp.zeros((Npad - N, C, HW), jnp.float32)], axis=0)

    kernel = make_fused_kernel(B, H, W, C, Cb, G, GUARD)

    newT = pl.pallas_call(
        kernel,
        out_shape=jax.ShapeDtypeStruct((Npad, G, HW), jnp.float32),
        grid=(steps,),
        in_specs=[
            pl.BlockSpec((B, C, HW), lambda n: (n, 0, 0)),      # x block
            pl.BlockSpec((C, 1), lambda n: (0, 0)),             # BN1 scale (sublane)
            pl.BlockSpec((C, 1), lambda n: (0, 0)),             # BN1 shift (sublane)
            pl.BlockSpec((1, C), lambda n: (0, 0)),             # BN1 scale (lane, SE path)
            pl.BlockSpec((1, C), lambda n: (0, 0)),             # BN1 shift (lane, SE path)
            pl.BlockSpec((C16, C), lambda n: (0, 0)),           # SE down weights
            pl.BlockSpec((C, C16), lambda n: (0, 0)),           # SE up weights
            pl.BlockSpec((Cb, C), lambda n: (0, 0)),            # conv1 * BN2-scale
            pl.BlockSpec((Cb, 1), lambda n: (0, 0)),            # BN2 shift (bias)
            pl.BlockSpec((G, 9 * Cb), lambda n: (0, 0)),        # conv2 taps (ky,kx,c)
            pl.BlockSpec((2, HW), lambda n: (0, 0)),            # row-wrap lane masks
        ],
        out_specs=pl.BlockSpec((B, G, HW), lambda n: (n, 0, 0)),
        scratch_shapes=[pltpu.VMEM((B, Cb, HW + 2 * GUARD), jnp.float32)],
        compiler_params=pltpu.CompilerParams(dimension_semantics=("parallel",)),
    )(x_f, sc1c, sh1c, sc1r, sh1r, wd, wu, w1s, sh2c, w2f, cmask)

    new_features = newT[:N].reshape(N, G, H, W)                 # free reshape (no transpose)
    return jnp.concatenate([x_nchw, new_features], axis=1)      # (N, C+G, H, W)


# ----------------------------- pure-JAX reference ----------------------------


def reference_forward(x, p):
    eps = 1e-5

    def bn(v, gamma, beta, mean, var):
        sc = gamma / jnp.sqrt(var + eps)
        return v * sc[None, :, None, None] + (beta - mean * sc)[None, :, None, None]

    C16 = p["wd"].shape[0]
    C = p["wd"].shape[1]
    x0 = bn(x, p["gamma1"], p["beta1"], p["mean1"], p["var1"])
    pooled = jnp.mean(x0, axis=(2, 3))
    z = jax.nn.relu(pooled @ p["wd"].reshape(C16, C).T)
    s = jax.nn.sigmoid(z @ p["wu"].reshape(C, C16).T)
    x0 = jax.nn.relu(s[:, :, None, None] * x0)
    dn = ("NCHW", "OIHW", "NCHW")
    y = jax.lax.conv_general_dilated(x0, p["w1"], (1, 1), "VALID",
                                     dimension_numbers=dn,
                                     precision=jax.lax.Precision.HIGHEST)
    y = jax.nn.relu(bn(y, p["gamma2"], p["beta2"], p["mean2"], p["var2"]))
    nf = jax.lax.conv_general_dilated(y, p["w2"], (1, 1), ((1, 1), (1, 1)),
                                      dimension_numbers=dn,
                                      precision=jax.lax.Precision.HIGHEST)
    return jnp.concatenate([x, nf], axis=1)


# ----------------------------------- main ------------------------------------


if __name__ == "__main__":
    key = jax.random.PRNGKey(0)
    N, C, H, W = 2, 32, 16, 16
    growth_rate, bn_size = 8, 4
    Cb = bn_size * growth_rate        # 32
    G = growth_rate                   # 8
    C16 = C // 16                     # 2

    ks = jax.random.split(key, 16)
    params = {
        "gamma1": jax.random.uniform(ks[0], (C,), jnp.float32, 0.5, 1.5),
        "beta1":  0.1 * jax.random.normal(ks[1], (C,), jnp.float32),
        "mean1":  0.1 * jax.random.normal(ks[2], (C,), jnp.float32),
        "var1":   jax.random.uniform(ks[3], (C,), jnp.float32, 0.5, 1.5),
        "gamma2": jax.random.uniform(ks[4], (Cb,), jnp.float32, 0.5, 1.5),
        "beta2":  0.1 * jax.random.normal(ks[5], (Cb,), jnp.float32),
        "mean2":  0.1 * jax.random.normal(ks[6], (Cb,), jnp.float32),
        "var2":   jax.random.uniform(ks[7], (Cb,), jnp.float32, 0.5, 1.5),
        "w1":     0.1 * jax.random.normal(ks[8], (Cb, C, 1, 1), jnp.float32),
        "w2":     0.1 * jax.random.normal(ks[9], (G, Cb, 3, 3), jnp.float32),
        "wd":     0.2 * jax.random.normal(ks[10], (C16, C, 1, 1), jnp.float32),
        "wu":     0.2 * jax.random.normal(ks[11], (C, C16, 1, 1), jnp.float32),
    }
    x = jax.random.normal(ks[12], (N, C, H, W), jnp.float32)

    fwd = jax.jit(functools.partial(se_dense_layer_forward, drop_rate=0.0))
    out = fwd(x, params)
    out = jax.block_until_ready(out)

    ref = jax.block_until_ready(reference_forward(x, params))
    assert out.shape == (N, C + G, H, W), out.shape
    assert jnp.allclose(out, ref, rtol=5e-3, atol=5e-3), \
        float(jnp.max(jnp.abs(out - ref)))

    print("KERNEL_OK")
</pallas_src>

<mosaic_0001>
module attributes {stable_mosaic.version = 11 : i64} {
  func.func @kernel(%arg0: i32, %arg1: memref<1x32x256xf32, #tpu.memory_space<vmem>>, %arg2: memref<32x1xf32, #tpu.memory_space<vmem>>, %arg3: memref<32x1xf32, #tpu.memory_space<vmem>>, %arg4: memref<1x32xf32, #tpu.memory_space<vmem>>, %arg5: memref<1x32xf32, #tpu.memory_space<vmem>>, %arg6: memref<2x32xf32, #tpu.memory_space<vmem>>, %arg7: memref<32x2xf32, #tpu.memory_space<vmem>>, %arg8: memref<32x32xf32, #tpu.memory_space<vmem>>, %arg9: memref<32x1xf32, #tpu.memory_space<vmem>>, %arg10: memref<8x288xf32, #tpu.memory_space<vmem>>, %arg11: memref<2x256xf32, #tpu.memory_space<vmem>>, %arg12: memref<1x8x256xf32, #tpu.memory_space<vmem>>, %arg13: memref<1x32x320xf32, #tpu.memory_space<vmem>>) attributes {dimension_semantics = [#tpu.dimension_semantics<parallel>], iteration_bounds = array<i64: 2>, scalar_prefetch = 0 : i64, scratch_operands = 1 : i64, tpu.core_type = #tpu.core_type<tc>, window_params = [{transform_indices = @transform_0, window_bounds = array<i64: 1, 32, 256>}, {pipeline_mode = #tpu.pipeline_mode<synchronous>, transform_indices = @transform_1, window_bounds = array<i64: 32, 1>}, {pipeline_mode = #tpu.pipeline_mode<synchronous>, transform_indices = @transform_2, window_bounds = array<i64: 32, 1>}, {pipeline_mode = #tpu.pipeline_mode<synchronous>, transform_indices = @transform_3, window_bounds = array<i64: 1, 32>}, {pipeline_mode = #tpu.pipeline_mode<synchronous>, transform_indices = @transform_4, window_bounds = array<i64: 1, 32>}, {pipeline_mode = #tpu.pipeline_mode<synchronous>, transform_indices = @transform_5, window_bounds = array<i64: 2, 32>}, {pipeline_mode = #tpu.pipeline_mode<synchronous>, transform_indices = @transform_6, window_bounds = array<i64: 32, 2>}, {pipeline_mode = #tpu.pipeline_mode<synchronous>, transform_indices = @transform_7, window_bounds = array<i64: 32, 32>}, {pipeline_mode = #tpu.pipeline_mode<synchronous>, transform_indices = @transform_8, window_bounds = array<i64: 32, 1>}, {pipeline_mode = #tpu.pipeline_mode<synchronous>, transform_indices = @transform_9, window_bounds = array<i64: 8, 288>}, {pipeline_mode = #tpu.pipeline_mode<synchronous>, transform_indices = @transform_10, window_bounds = array<i64: 2, 256>}, {transform_indices = @transform_11, window_bounds = array<i64: 1, 8, 256>}]} {
    %cst = arith.constant 0.000000e+00 : f32
    %0 = vector.broadcast %cst : f32 to vector<1x32x32xf32>
    %c0 = arith.constant 0 : index
    %c0_0 = arith.constant 0 : index
    %c0_1 = arith.constant 0 : index
    %1 = vector.load %arg13[%c0, %c0_0, %c0_1] : memref<1x32x320xf32, #tpu.memory_space<vmem>>, vector<1x32x32xf32>
    tpu.vector_store %arg13[%c0, %c0_0, %c0_1], %0 {strides = array<i32>} : memref<1x32x320xf32, #tpu.memory_space<vmem>>, vector<1x32x32xf32>,
    %c0_2 = arith.constant 0 : index
    %c0_3 = arith.constant 0 : index
    %c288 = arith.constant 288 : index
    %2 = vector.load %arg13[%c0_2, %c0_3, %c288] : memref<1x32x320xf32, #tpu.memory_space<vmem>>, vector<1x32x32xf32>
    tpu.vector_store %arg13[%c0_2, %c0_3, %c288], %0 {strides = array<i32>} : memref<1x32x320xf32, #tpu.memory_space<vmem>>, vector<1x32x32xf32>,
    %c0_4 = arith.constant 0 : index
    %c0_5 = arith.constant 0 : index
    %c0_6 = arith.constant 0 : index
    %3 = vector.load %arg1[%c0_4, %c0_5, %c0_6] : memref<1x32x256xf32, #tpu.memory_space<vmem>>, vector<1x32x256xf32>
    %cst_7 = arith.constant dense<0.000000e+00> : vector<1x32xf32>
    %4 = vector.multi_reduction <add>, %3, %cst_7 [2] : vector<1x32x256xf32> to vector<1x32xf32>
    %cst_8 = arith.constant 3.906250e-03 : f32
    %5 = vector.broadcast %cst_8 : f32 to vector<1x32xf32>
    %6 = arith.mulf %4, %5 : vector<1x32xf32>
    %c0_9 = arith.constant 0 : index
    %c0_10 = arith.constant 0 : index
    %7 = vector.load %arg4[%c0_9, %c0_10] : memref<1x32xf32, #tpu.memory_space<vmem>>, vector<1x32xf32>
    %8 = arith.mulf %6, %7 : vector<1x32xf32>
    %c0_11 = arith.constant 0 : index
    %c0_12 = arith.constant 0 : index
    %9 = vector.load %arg5[%c0_11, %c0_12] : memref<1x32xf32, #tpu.memory_space<vmem>>, vector<1x32xf32>
    %10 = arith.addf %8, %9 : vector<1x32xf32>
    %11 = vector.shape_cast %10 : vector<1x32xf32> to vector<1x1x32xf32>
    %c0_13 = arith.constant 0 : index
    %c0_14 = arith.constant 0 : index
    %12 = vector.load %arg6[%c0_13, %c0_14] : memref<2x32xf32, #tpu.memory_space<vmem>>, vector<2x32xf32>
    %13 = vector.shape_cast %12 : vector<2x32xf32> to vector<1x2x32xf32>
    %14 = vector.broadcast %11 : vector<1x1x32xf32> to vector<1x2x32xf32>
    %15 = arith.mulf %14, %13 : vector<1x2x32xf32>
    %cst_15 = arith.constant dense<0.000000e+00> : vector<1x2xf32>
    %16 = vector.multi_reduction <add>, %15, %cst_15 [2] : vector<1x2x32xf32> to vector<1x2xf32>
    %cst_16 = arith.constant 0.000000e+00 : f32
    %17 = vector.broadcast %cst_16 : f32 to vector<1x2xf32>
    %18 = arith.maximumf %16, %17 : vector<1x2xf32>
    %19 = vector.shape_cast %18 : vector<1x2xf32> to vector<1x1x2xf32>
    %c0_17 = arith.constant 0 : index
    %c0_18 = arith.constant 0 : index
    %20 = vector.load %arg7[%c0_17, %c0_18] : memref<32x2xf32, #tpu.memory_space<vmem>>, vector<32x2xf32>
    %21 = vector.shape_cast %20 : vector<32x2xf32> to vector<1x32x2xf32>
    %22 = vector.broadcast %19 : vector<1x1x2xf32> to vector<1x32x2xf32>
    %23 = arith.mulf %22, %21 : vector<1x32x2xf32>
    %cst_19 = arith.constant dense<0.000000e+00> : vector<1x32xf32>
    %24 = vector.multi_reduction <add>, %23, %cst_19 [2] : vector<1x32x2xf32> to vector<1x32xf32>
    %cst_20 = arith.constant 0.000000e+00 : f32
    %25 = vector.broadcast %cst_20 : f32 to vector<1x32xf32>
    %26 = arith.subf %25, %24 : vector<1x32xf32>
    %27 = math.exp %26 : vector<1x32xf32>
    %cst_21 = arith.constant 1.000000e+00 : f32
    %28 = vector.broadcast %cst_21 : f32 to vector<1x32xf32>
    %29 = arith.addf %28, %27 : vector<1x32xf32>
    %cst_22 = arith.constant 1.000000e+00 : f32
    %30 = vector.broadcast %cst_22 : f32 to vector<1x32xf32>
    %31 = arith.divf %30, %29 : vector<1x32xf32>
    %c0_23 = arith.constant 0 : index
    %c0_24 = arith.constant 0 : index
    %32 = vector.load %arg11[%c0_23, %c0_24] : memref<2x256xf32, #tpu.memory_space<vmem>>, vector<1x256xf32>
    %c1 = arith.constant 1 : index
    %c0_25 = arith.constant 0 : index
    %33 = vector.load %arg11[%c1, %c0_25] : memref<2x256xf32, #tpu.memory_space<vmem>>, vector<1x256xf32>
    %c0_26 = arith.constant 0 : index
    %c0_27 = arith.constant 0 : index
    %c0_28 = arith.constant 0 : index
    %34 = vector.load %arg1[%c0_26, %c0_27, %c0_28] : memref<1x32x256xf32, #tpu.memory_space<vmem>>, vector<1x32x256xf32>
    %35 = vector.shape_cast %34 : vector<1x32x256xf32> to vector<32x256xf32>
    %c0_29 = arith.constant 0 : index
    %c0_30 = arith.constant 0 : index
    %36 = vector.load %arg2[%c0_29, %c0_30] : memref<32x1xf32, #tpu.memory_space<vmem>>, vector<32x1xf32>
    %37 = vector.broadcast %36 : vector<32x1xf32> to vector<32x256xf32>
    %38 = arith.mulf %35, %37 : vector<32x256xf32>
    %c0_31 = arith.constant 0 : index
    %c0_32 = arith.constant 0 : index
    %39 = vector.load %arg3[%c0_31, %c0_32] : memref<32x1xf32, #tpu.memory_space<vmem>>, vector<32x1xf32>
    %40 = vector.broadcast %39 : vector<32x1xf32> to vector<32x256xf32>
    %41 = arith.addf %38, %40 : vector<32x256xf32>
    %cst_33 = arith.constant 0.000000e+00 : f32
    %42 = vector.broadcast %cst_33 : f32 to vector<32x256xf32>
    %43 = arith.maximumf %41, %42 : vector<32x256xf32>
    %c0_34 = arith.constant 0 : index
    %c0_35 = arith.constant 0 : index
    %44 = vector.load %arg8[%c0_34, %c0_35] : memref<32x32xf32, #tpu.memory_space<vmem>>, vector<32x32xf32>
    %45 = vector.broadcast %31 : vector<1x32xf32> to vector<32x32xf32>
    %46 = arith.mulf %44, %45 : vector<32x32xf32>
    %cst_36 = arith.constant dense<0.000000e+00> : vector<32x256xf32>
    %47 = tpu.matmul %46, %43, %cst_36 {dimension_numbers = #tpu.dot_dimension_numbers<[1], [0], [0], [1], [0, 0, 1, 1], [], []>} : vector<32x32xf32>, vector<32x256xf32>, vector<32x256xf32> -> vector<32x256xf32>
    %c0_37 = arith.constant 0 : index
    %c0_38 = arith.constant 0 : index
    %48 = vector.load %arg9[%c0_37, %c0_38] : memref<32x1xf32, #tpu.memory_space<vmem>>, vector<32x1xf32>
    %49 = vector.broadcast %48 : vector<32x1xf32> to vector<32x256xf32>
    %50 = arith.addf %47, %49 : vector<32x256xf32>
    %cst_39 = arith.constant 0.000000e+00 : f32
    %51 = vector.broadcast %cst_39 : f32 to vector<32x256xf32>
    %52 = arith.maximumf %50, %51 : vector<32x256xf32>
    %c0_40 = arith.constant 0 : index
    %c0_41 = arith.constant 0 : index
    %c32 = arith.constant 32 : index
    %53 = vector.load %arg13[%c0_40, %c0_41, %c32] : memref<1x32x320xf32, #tpu.memory_space<vmem>>, vector<1x32x256xf32>
    %54 = vector.shape_cast %53 : vector<1x32x256xf32> to vector<32x256xf32>
    %55 = vector.shape_cast %52 : vector<32x256xf32> to vector<1x32x256xf32>
    tpu.vector_store %arg13[%c0_40, %c0_41, %c32], %55 {strides = array<i32>} : memref<1x32x320xf32, #tpu.memory_space<vmem>>, vector<1x32x256xf32>,
    %c0_42 = arith.constant 0 : index
    %c0_43 = arith.constant 0 : index
    %c15 = arith.constant 15 : index
    %56 = vector.load %arg13[%c0_42, %c0_43, %c15] : memref<1x32x320xf32, #tpu.memory_space<vmem>>, vector<1x32x256xf32>
    %57 = vector.shape_cast %56 : vector<1x32x256xf32> to vector<32x256xf32>
    %58 = vector.broadcast %32 : vector<1x256xf32> to vector<32x256xf32>
    %59 = arith.mulf %57, %58 : vector<32x256xf32>
    %c0_44 = arith.constant 0 : index
    %c0_45 = arith.constant 0 : index
    %c16 = arith.constant 16 : index
    %60 = vector.load %arg13[%c0_44, %c0_45, %c16] : memref<1x32x320xf32, #tpu.memory_space<vmem>>, vector<1x32x256xf32>
    %61 = vector.shape_cast %60 : vector<1x32x256xf32> to vector<32x256xf32>
    %c0_46 = arith.constant 0 : index
    %c0_47 = arith.constant 0 : index
    %c17 = arith.constant 17 : index
    %62 = vector.load %arg13[%c0_46, %c0_47, %c17] : memref<1x32x320xf32, #tpu.memory_space<vmem>>, vector<1x32x256xf32>
    %63 = vector.shape_cast %62 : vector<1x32x256xf32> to vector<32x256xf32>
    %64 = vector.broadcast %33 : vector<1x256xf32> to vector<32x256xf32>
    %65 = arith.mulf %63, %64 : vector<32x256xf32>
    %c0_48 = arith.constant 0 : index
    %c0_49 = arith.constant 0 : index
    %c31 = arith.constant 31 : index
    %66 = vector.load %arg13[%c0_48, %c0_49, %c31] : memref<1x32x320xf32, #tpu.memory_space<vmem>>, vector<1x32x256xf32>
    %67 = vector.shape_cast %66 : vector<1x32x256xf32> to vector<32x256xf32>
    %68 = vector.broadcast %32 : vector<1x256xf32> to vector<32x256xf32>
    %69 = arith.mulf %67, %68 : vector<32x256xf32>
    %c0_50 = arith.constant 0 : index
    %c0_51 = arith.constant 0 : index
    %c32_52 = arith.constant 32 : index
    %70 = vector.load %arg13[%c0_50, %c0_51, %c32_52] : memref<1x32x320xf32, #tpu.memory_space<vmem>>, vector<1x32x256xf32>
    %71 = vector.shape_cast %70 : vector<1x32x256xf32> to vector<32x256xf32>
    %c0_53 = arith.constant 0 : index
    %c0_54 = arith.constant 0 : index
    %c33 = arith.constant 33 : index
    %72 = vector.load %arg13[%c0_53, %c0_54, %c33] : memref<1x32x320xf32, #tpu.memory_space<vmem>>, vector<1x32x256xf32>
    %73 = vector.shape_cast %72 : vector<1x32x256xf32> to vector<32x256xf32>
    %74 = vector.broadcast %33 : vector<1x256xf32> to vector<32x256xf32>
    %75 = arith.mulf %73, %74 : vector<32x256xf32>
    %c0_55 = arith.constant 0 : index
    %c0_56 = arith.constant 0 : index
    %c47 = arith.constant 47 : index
    %76 = vector.load %arg13[%c0_55, %c0_56, %c47] : memref<1x32x320xf32, #tpu.memory_space<vmem>>, vector<1x32x256xf32>
    %77 = vector.shape_cast %76 : vector<1x32x256xf32> to vector<32x256xf32>
    %78 = vector.broadcast %32 : vector<1x256xf32> to vector<32x256xf32>
    %79 = arith.mulf %77, %78 : vector<32x256xf32>
    %c0_57 = arith.constant 0 : index
    %c0_58 = arith.constant 0 : index
    %c48 = arith.constant 48 : index
    %80 = vector.load %arg13[%c0_57, %c0_58, %c48] : memref<1x32x320xf32, #tpu.memory_space<vmem>>, vector<1x32x256xf32>
    %81 = vector.shape_cast %80 : vector<1x32x256xf32> to vector<32x256xf32>
    %c0_59 = arith.constant 0 : index
    %c0_60 = arith.constant 0 : index
    %c49 = arith.constant 49 : index
    %82 = vector.load %arg13[%c0_59, %c0_60, %c49] : memref<1x32x320xf32, #tpu.memory_space<vmem>>, vector<1x32x256xf32>
    %83 = vector.shape_cast %82 : vector<1x32x256xf32> to vector<32x256xf32>
    %84 = vector.broadcast %33 : vector<1x256xf32> to vector<32x256xf32>
    %85 = arith.mulf %83, %84 : vector<32x256xf32>
    %86 = tpu.concatenate %59, %61, %65, %69, %71, %75, %79, %81, %85 in 0 : vector<32x256xf32>, vector<32x256xf32>, vector<32x256xf32>, vector<32x256xf32>, vector<32x256xf32>, vector<32x256xf32>, vector<32x256xf32>, vector<32x256xf32>, vector<32x256xf32> -> vector<288x256xf32>
    %c0_61 = arith.constant 0 : index
    %c0_62 = arith.constant 0 : index
    %87 = vector.load %arg10[%c0_61, %c0_62] : memref<8x288xf32, #tpu.memory_space<vmem>>, vector<8x288xf32>
    %cst_63 = arith.constant dense<0.000000e+00> : vector<8x256xf32>
    %88 = tpu.matmul %87, %86, %cst_63 {dimension_numbers = #tpu.dot_dimension_numbers<[1], [0], [0], [1], [0, 0, 1, 1], [], []>} : vector<8x288xf32>, vector<288x256xf32>, vector<8x256xf32> -> vector<8x256xf32>
    %c0_64 = arith.constant 0 : index
    %c0_65 = arith.constant 0 : index
    %c0_66 = arith.constant 0 : index
    %89 = vector.load %arg12[%c0_64, %c0_65, %c0_66] : memref<1x8x256xf32, #tpu.memory_space<vmem>>, vector<1x8x256xf32>
    %90 = vector.shape_cast %89 : vector<1x8x256xf32> to vector<8x256xf32>
    %91 = vector.shape_cast %88 : vector<8x256xf32> to vector<1x8x256xf32>
    tpu.vector_store %arg12[%c0_64, %c0_65, %c0_66], %91 {strides = array<i32>} : memref<1x8x256xf32, #tpu.memory_space<vmem>>, vector<1x8x256xf32>,
    return
  }
  func.func @transform_0(%arg0: i32) -> (i32, i32, i32) {
    %c0_i32 = arith.constant 0 : i32
    %c0_i32_0 = arith.constant 0 : i32
    %c0_i32_1 = arith.constant 0 : i32
    return %arg0, %c0_i32, %c0_i32_0 : i32, i32, i32
  }
  func.func @transform_1(%arg0: i32) -> (i32, i32) {
    %c0_i32 = arith.constant 0 : i32
    %c0_i32_0 = arith.constant 0 : i32
    %c0_i32_1 = arith.constant 0 : i32
    return %c0_i32, %c0_i32_0 : i32, i32
  }
  func.func @transform_2(%arg0: i32) -> (i32, i32) {
    %c0_i32 = arith.constant 0 : i32
    %c0_i32_0 = arith.constant 0 : i32
    %c0_i32_1 = arith.constant 0 : i32
    return %c0_i32, %c0_i32_0 : i32, i32
  }
  func.func @transform_3(%arg0: i32) -> (i32, i32) {
    %c0_i32 = arith.constant 0 : i32
    %c0_i32_0 = arith.constant 0 : i32
    %c0_i32_1 = arith.constant 0 : i32
    return %c0_i32, %c0_i32_0 : i32, i32
  }
  func.func @transform_4(%arg0: i32) -> (i32, i32) {
    %c0_i32 = arith.constant 0 : i32
    %c0_i32_0 = arith.constant 0 : i32
    %c0_i32_1 = arith.constant 0 : i32
    return %c0_i32, %c0_i32_0 : i32, i32
  }
  func.func @transform_5(%arg0: i32) -> (i32, i32) {
    %c0_i32 = arith.constant 0 : i32
    %c0_i32_0 = arith.constant 0 : i32
    %c0_i32_1 = arith.constant 0 : i32
    return %c0_i32, %c0_i32_0 : i32, i32
  }
  func.func @transform_6(%arg0: i32) -> (i32, i32) {
    %c0_i32 = arith.constant 0 : i32
    %c0_i32_0 = arith.constant 0 : i32
    %c0_i32_1 = arith.constant 0 : i32
    return %c0_i32, %c0_i32_0 : i32, i32
  }
  func.func @transform_7(%arg0: i32) -> (i32, i32) {
    %c0_i32 = arith.constant 0 : i32
    %c0_i32_0 = arith.constant 0 : i32
    %c0_i32_1 = arith.constant 0 : i32
    return %c0_i32, %c0_i32_0 : i32, i32
  }
  func.func @transform_8(%arg0: i32) -> (i32, i32) {
    %c0_i32 = arith.constant 0 : i32
    %c0_i32_0 = arith.constant 0 : i32
    %c0_i32_1 = arith.constant 0 : i32
    return %c0_i32, %c0_i32_0 : i32, i32
  }
  func.func @transform_9(%arg0: i32) -> (i32, i32) {
    %c0_i32 = arith.constant 0 : i32
    %c0_i32_0 = arith.constant 0 : i32
    %c0_i32_1 = arith.constant 0 : i32
    return %c0_i32, %c0_i32_0 : i32, i32
  }
  func.func @transform_10(%arg0: i32) -> (i32, i32) {
    %c0_i32 = arith.constant 0 : i32
    %c0_i32_0 = arith.constant 0 : i32
    %c0_i32_1 = arith.constant 0 : i32
    return %c0_i32, %c0_i32_0 : i32, i32
  }
  func.func @transform_11(%arg0: i32) -> (i32, i32, i32) {
    %c0_i32 = arith.constant 0 : i32
    %c0_i32_0 = arith.constant 0 : i32
    %c0_i32_1 = arith.constant 0 : i32
    return %arg0, %c0_i32, %c0_i32_0 : i32, i32, i32
  }
}

</mosaic_0001>

<llo_original>
// kernel: se_dense_layer_forward.1
$region0: #{se_dense_layer_forward.1}
  #allocation0 [shape = 'u32[]', space=smem, size = 0x4, offset = 0x4, fixed_abs, tag = 'smem constant byte address 0x4 - core index']
  #allocation1 [shape = 'u32[144,128]{1,0:T(1,128)}', space=vmem, size = 0x12000, scoped, tag = 'internal scratch']
  #allocation2 [shape = 'f32[1,32,320]{2,1,0:T(8,128)}', space=vmem, size = 0xc000, scoped, tag = 'scratch operand']
  %s0 = inlined_call_operand.vmem [shape: f32[2,32,256], index: 0, kind: input, shape index: {}]
  %s1 = inlined_call_operand.vmem [shape: f32[32,1], index: 1, kind: input, shape index: {}]
  %s2 = inlined_call_operand.vmem [shape: f32[32,1], index: 2, kind: input, shape index: {}]
  %s3 = inlined_call_operand.vmem [shape: f32[1,32], index: 3, kind: input, shape index: {}]
  %s4 = inlined_call_operand.vmem [shape: f32[1,32], index: 4, kind: input, shape index: {}]
  %s5 = inlined_call_operand.vmem [shape: f32[2,32], index: 5, kind: input, shape index: {}]
  %s6 = inlined_call_operand.vmem [shape: f32[32,2], index: 6, kind: input, shape index: {}]
  %s7 = inlined_call_operand.vmem [shape: f32[32,32], index: 7, kind: input, shape index: {}]
  %s8 = inlined_call_operand.vmem [shape: f32[32,1], index: 8, kind: input, shape index: {}]
  %s9 = inlined_call_operand.vmem [shape: f32[8,288], index: 9, kind: input, shape index: {}]
  %s10 = inlined_call_operand.vmem [shape: f32[2,256], index: 10, kind: input, shape index: {}]
  %s11 = inlined_call_operand.vmem [shape: f32[2,8,256], index: 11, kind: output, shape index: {}]
  %s12 = sld [smem:[#allocation0]]
  $region77: #{se_dense_layer_forward.1} parent=0
    _
  %s14 = ssub.s32 1, %s12
  %s15 = scalar_select 0, %s14, %s12
  loop: start=0, step=1, limit=4
  $region2: #{se_dense_layer_forward.1} parent=0 // loop_pre_header
    _
  $region3: #{se_dense_layer_forward.1} parent=0 // loop_header
    %s17 = sphi 0, %s21
    %p18 = scmp.ge.s32.totalorder %s17, 4
    %s27 = sphi 0, %s29
    %s30 = sphi 0, %s27
    %s31 = sphi 0, %s30
    %s47 = sphi 0, %s31
    %s51 = sphi 0, %s51
    %s53 = sphi 0, %s51
    %s54 = sphi 0, %s53
    %s68 = sphi 0, %s54
    %s72 = sphi 0, %s72
    %s74 = sphi 0, %s72
    %s75 = sphi 0, %s74
    %s89 = sphi 0, %s75
    %s93 = sphi 0, %s93
    %s95 = sphi 0, %s93
    %s96 = sphi 0, %s95
    %s110 = sphi 0, %s96
    %s114 = sphi 0, %s114
    %s116 = sphi 0, %s114
    %s117 = sphi 0, %s116
    %s131 = sphi 0, %s117
    %s135 = sphi 0, %s135
    %s137 = sphi 0, %s135
    %s138 = sphi 0, %s137
    %s152 = sphi 0, %s138
    %s156 = sphi 0, %s156
    %s158 = sphi 0, %s156
    %s159 = sphi 0, %s158
    %s173 = sphi 0, %s159
    %s177 = sphi 0, %s177
    %s179 = sphi 0, %s177
    %s180 = sphi 0, %s179
    %s194 = sphi 0, %s180
    %s198 = sphi 0, %s198
    %s200 = sphi 0, %s198
    %s201 = sphi 0, %s200
    %s215 = sphi 0, %s201
    %s219 = sphi 0, %s219
    %s221 = sphi 0, %s219
    %s222 = sphi 0, %s221
    %s236 = sphi 0, %s222
    %s240 = sphi 0, %s240
    %s242 = sphi 0, %s240
    %s243 = sphi 0, %s242
    %s257 = sphi 0, %s243
    %s263 = sphi 0, %s265
    %s266 = sphi 0, %s263
    %s267 = sphi 0, %s266
    %s283 = sphi 0, %s267
  $region4: #{se_dense_layer_forward.1} parent=0 // loop_header_branch
    %20 = sbr.rel (%p18) target = $region8
  $region5: #{se_dense_layer_forward.1} parent=0 // loop_body
    %s22 = ssub.s32 %s17, 1
    %s23 = ssub.s32 %s17, 2
    %s24 = sadd.s32 %s17, 1
    %s25 = ssub.s32 %s17, %s24
    %p26 = scmp.eq.s32.totalorder %s25, 0
    %s28 = sadd.s32 %s27, 1
    %s29 = scalar_select %p26, %s27, %s28
    %p32 = pneg %p26
    %p33 = scmp.eq.s32.totalorder %s17, 1
    %p34 = por %p32, %p33
    %p35 = scmp.ne.s32.totalorder %s27, %s30
    %p36 = scmp.eq.s32.totalorder %s17, 0
    %p37 = por %p35, %p36
    %p38 = scmp.ne.s32.totalorder %s27, %s30
    %p39 = scmp.eq.s32.totalorder %s22, 1
    %p40 = por %p38, %p39
    %p41 = scmp.ne.s32.totalorder %s30, %s31
    %p42 = scmp.eq.s32.totalorder %s22, 0
    %p43 = por %p41, %p42
    %p44 = scmp.ne.s32.totalorder %s30, %s31
    %p45 = scmp.eq.s32.totalorder %s23, 1
    %p46 = por %p44, %p45
    %p48 = scmp.ne.s32.totalorder %s31, %s47
    %p49 = scmp.eq.s32.totalorder %s23, 0
    %p50 = por %p48, %p49
    %s52 = sadd.s32 %s51, 1
    %p55 = scmp.eq.s32.totalorder %s17, 1
    %p56 = scmp.ne.s32.totalorder %s51, %s53
    %p57 = scmp.eq.s32.totalorder %s17, 0
    %p58 = por %p56, %p57
    %p59 = scmp.ne.s32.totalorder %s51, %s53
    %p60 = scmp.eq.s32.totalorder %s22, 1
    %p61 = por %p59, %p60
    %p62 = scmp.ne.s32.totalorder %s53, %s54
    %p63 = scmp.eq.s32.totalorder %s22, 0
    %p64 = por %p62, %p63
    %p65 = scmp.ne.s32.totalorder %s53, %s54
    %p66 = scmp.eq.s32.totalorder %s23, 1
    %p67 = por %p65, %p66
    %p69 = scmp.ne.s32.totalorder %s54, %s68
    %p70 = scmp.eq.s32.totalorder %s23, 0
    %p71 = por %p69, %p70
    %s73 = sadd.s32 %s72, 1
    %p76 = scmp.eq.s32.totalorder %s17, 1
    %p77 = scmp.ne.s32.totalorder %s72, %s74
    %p78 = scmp.eq.s32.totalorder %s17, 0
    %p79 = por %p77, %p78
    %p80 = scmp.ne.s32.totalorder %s72, %s74
    %p81 = scmp.eq.s32.totalorder %s22, 1
    %p82 = por %p80, %p81
    %p83 = scmp.ne.s32.totalorder %s74, %s75
    %p84 = scmp.eq.s32.totalorder %s22, 0
    %p85 = por %p83, %p84
    %p86 = scmp.ne.s32.totalorder %s74, %s75
    %p87 = scmp.eq.s32.totalorder %s23, 1
    %p88 = por %p86, %p87
    %p90 = scmp.ne.s32.totalorder %s75, %s89
    %p91 = scmp.eq.s32.totalorder %s23, 0
    %p92 = por %p90, %p91
    %s94 = sadd.s32 %s93, 1
    %p97 = scmp.eq.s32.totalorder %s17, 1
    %p98 = scmp.ne.s32.totalorder %s93, %s95
    %p99 = scmp.eq.s32.totalorder %s17, 0
    %p100 = por %p98, %p99
    %p101 = scmp.ne.s32.totalorder %s93, %s95
    %p102 = scmp.eq.s32.totalorder %s22, 1
    %p103 = por %p101, %p102
    %p104 = scmp.ne.s32.totalorder %s95, %s96
    %p105 = scmp.eq.s32.totalorder %s22, 0
    %p106 = por %p104, %p105
    %p107 = scmp.ne.s32.totalorder %s95, %s96
    %p108 = scmp.eq.s32.totalorder %s23, 1
    %p109 = por %p107, %p108
    %p111 = scmp.ne.s32.totalorder %s96, %s110
    %p112 = scmp.eq.s32.totalorder %s23, 0
    %p113 = por %p111, %p112
    %s115 = sadd.s32 %s114, 1
    %p118 = scmp.eq.s32.totalorder %s17, 1
    %p119 = scmp.ne.s32.totalorder %s114, %s116
    %p120 = scmp.eq.s32.totalorder %s17, 0
    %p121 = por %p119, %p120
    %p122 = scmp.ne.s32.totalorder %s114, %s116
    %p123 = scmp.eq.s32.totalorder %s22, 1
    %p124 = por %p122, %p123
    %p125 = scmp.ne.s32.totalorder %s116, %s117
    %p126 = scmp.eq.s32.totalorder %s22, 0
    %p127 = por %p125, %p126
    %p128 = scmp.ne.s32.totalorder %s116, %s117
    %p129 = scmp.eq.s32.totalorder %s23, 1
    %p130 = por %p128, %p129
    %p132 = scmp.ne.s32.totalorder %s117, %s131
    %p133 = scmp.eq.s32.totalorder %s23, 0
    %p134 = por %p132, %p133
    %s136 = sadd.s32 %s135, 1
    %p139 = scmp.eq.s32.totalorder %s17, 1
    %p140 = scmp.ne.s32.totalorder %s135, %s137
    %p141 = scmp.eq.s32.totalorder %s17, 0
    %p142 = por %p140, %p141
    %p143 = scmp.ne.s32.totalorder %s135, %s137
    %p144 = scmp.eq.s32.totalorder %s22, 1
    %p145 = por %p143, %p144
    %p146 = scmp.ne.s32.totalorder %s137, %s138
    %p147 = scmp.eq.s32.totalorder %s22, 0
    %p148 = por %p146, %p147
    %p149 = scmp.ne.s32.totalorder %s137, %s138
    %p150 = scmp.eq.s32.totalorder %s23, 1
    %p151 = por %p149, %p150
    %p153 = scmp.ne.s32.totalorder %s138, %s152
    %p154 = scmp.eq.s32.totalorder %s23, 0
    %p155 = por %p153, %p154
    %s157 = sadd.s32 %s156, 1
    %p160 = scmp.eq.s32.totalorder %s17, 1
    %p161 = scmp.ne.s32.totalorder %s156, %s158
    %p162 = scmp.eq.s32.totalorder %s17, 0
    %p163 = por %p161, %p162
    %p164 = scmp.ne.s32.totalorder %s156, %s158
    %p165 = scmp.eq.s32.totalorder %s22, 1
    %p166 = por %p164, %p165
    %p167 = scmp.ne.s32.totalorder %s158, %s159
    %p168 = scmp.eq.s32.totalorder %s22, 0
    %p169 = por %p167, %p168
    %p170 = scmp.ne.s32.totalorder %s158, %s159
    %p171 = scmp.eq.s32.totalorder %s23, 1
    %p172 = por %p170, %p171
    %p174 = scmp.ne.s32.totalorder %s159, %s173
    %p175 = scmp.eq.s32.totalorder %s23, 0
    %p176 = por %p174, %p175
    %s178 = sadd.s32 %s177, 1
    %p181 = scmp.eq.s32.totalorder %s17, 1
    %p182 = scmp.ne.s32.totalorder %s177, %s179
    %p183 = scmp.eq.s32.totalorder %s17, 0
    %p184 = por %p182, %p183
    %p185 = scmp.ne.s32.totalorder %s177, %s179
    %p186 = scmp.eq.s32.totalorder %s22, 1
    %p187 = por %p185, %p186
    %p188 = scmp.ne.s32.totalorder %s179, %s180
    %p189 = scmp.eq.s32.totalorder %s22, 0
    %p190 = por %p188, %p189
    %p191 = scmp.ne.s32.totalorder %s179, %s180
    %p192 = scmp.eq.s32.totalorder %s23, 1
    %p193 = por %p191, %p192
    %p195 = scmp.ne.s32.totalorder %s180, %s194
    %p196 = scmp.eq.s32.totalorder %s23, 0
    %p197 = por %p195, %p196
    %s199 = sadd.s32 %s198, 1
    %p202 = scmp.eq.s32.totalorder %s17, 1
    %p203 = scmp.ne.s32.totalorder %s198, %s200
    %p204 = scmp.eq.s32.totalorder %s17, 0
    %p205 = por %p203, %p204
    %p206 = scmp.ne.s32.totalorder %s198, %s200
    %p207 = scmp.eq.s32.totalorder %s22, 1
    %p208 = por %p206, %p207
    %p209 = scmp.ne.s32.totalorder %s200, %s201
    %p210 = scmp.eq.s32.totalorder %s22, 0
    %p211 = por %p209, %p210
    %p212 = scmp.ne.s32.totalorder %s200, %s201
    %p213 = scmp.eq.s32.totalorder %s23, 1
    %p214 = por %p212, %p213
    %p216 = scmp.ne.s32.totalorder %s201, %s215
    %p217 = scmp.eq.s32.totalorder %s23, 0
    %p218 = por %p216, %p217
    %s220 = sadd.s32 %s219, 1
    %p223 = scmp.eq.s32.totalorder %s17, 1
    %p224 = scmp.ne.s32.totalorder %s219, %s221
    %p225 = scmp.eq.s32.totalorder %s17, 0
    %p226 = por %p224, %p225
    %p227 = scmp.ne.s32.totalorder %s219, %s221
    %p228 = scmp.eq.s32.totalorder %s22, 1
    %p229 = por %p227, %p228
    %p230 = scmp.ne.s32.totalorder %s221, %s222
    %p231 = scmp.eq.s32.totalorder %s22, 0
    %p232 = por %p230, %p231
    %p233 = scmp.ne.s32.totalorder %s221, %s222
    %p234 = scmp.eq.s32.totalorder %s23, 1
    %p235 = por %p233, %p234
    %p237 = scmp.ne.s32.totalorder %s222, %s236
    %p238 = scmp.eq.s32.totalorder %s23, 0
    %p239 = por %p237, %p238
    %s241 = sadd.s32 %s240, 1
    %p244 = scmp.eq.s32.totalorder %s17, 1
    %p245 = scmp.ne.s32.totalorder %s240, %s242
    %p246 = scmp.eq.s32.totalorder %s17, 0
    %p247 = por %p245, %p246
    %p248 = scmp.ne.s32.totalorder %s240, %s242
    %p249 = scmp.eq.s32.totalorder %s22, 1
    %p250 = por %p248, %p249
    %p251 = scmp.ne.s32.totalorder %s242, %s243
    %p252 = scmp.eq.s32.totalorder %s22, 0
    %p253 = por %p251, %p252
    %p254 = scmp.ne.s32.totalorder %s242, %s243
    %p255 = scmp.eq.s32.totalorder %s23, 1
    %p256 = por %p254, %p255
    %p258 = scmp.ne.s32.totalorder %s243, %s257
    %p259 = scmp.eq.s32.totalorder %s23, 0
    %p260 = por %p258, %p259
    %s261 = ssub.s32 %s17, %s24
    %p262 = scmp.eq.s32.totalorder %s261, 0
    %s264 = sadd.s32 %s263, 1
    %s265 = scalar_select %p262, %s263, %s264
    %p268 = pneg %p262
    %p269 = scmp.eq.s32.totalorder %s17, 1
    %p270 = por %p268, %p269
    %p271 = scmp.ne.s32.totalorder %s263, %s266
    %p272 = scmp.eq.s32.totalorder %s17, 0
    %p273 = por %p271, %p272
    %p274 = scmp.ne.s32.totalorder %s263, %s266
    %p275 = scmp.eq.s32.totalorder %s22, 1
    %p276 = por %p274, %p275
    %p277 = scmp.ne.s32.totalorder %s266, %s267
    %p278 = scmp.eq.s32.totalorder %s22, 0
    %p279 = por %p277, %p278
    %p280 = scmp.ne.s32.totalorder %s266, %s267
    %p281 = scmp.eq.s32.totalorder %s23, 1
    %p282 = por %p280, %p281
    %p284 = scmp.ne.s32.totalorder %s267, %s283
    %p285 = scmp.eq.s32.totalorder %s23, 0
    %p286 = por %p284, %p285
    %p287 = scmp.le.s32.totalorder 1, %s17
    %p288 = scmp.lt.s32.totalorder %s17, 3
    %p289 = pnand %p287, %p288
    %p290 = pneg %p289
    // Predicated region
    $region9: #{se_dense_layer_forward.1} parent=5 // pred_check
      _
    $region10: #{se_dense_layer_forward.1} parent=5 // pred_check_branch
      %292 = sbr.rel (%p289) target = $region12
    $region11: #{se_dense_layer_forward.1} parent=5 // pred_region
      %s293 = ssub.s32 %s17, 1
      // Predicated region
      $region13: #{se_dense_layer_forward.1} parent=11 // pred_check
        %p294 = pneg %p64
      $region14: #{se_dense_layer_forward.1} parent=11 // pred_check_branch
        %296 = sbr.rel (%p294) target = $region16
      $region15: #{se_dense_layer_forward.1} parent=11 // pred_region
        _
      $region16: #{se_dense_layer_forward.1} parent=11 // pred_fallthru
        _
      // Predicated region
      $region17: #{se_dense_layer_forward.1} parent=11 // pred_check
        %p297 = pneg %p85
      $region18: #{se_dense_layer_forward.1} parent=11 // pred_check_branch
        %299 = sbr.rel (%p297) target = $region20
      $region19: #{se_dense_layer_forward.1} parent=11 // pred_region
        _
      $region20: #{se_dense_layer_forward.1} parent=11 // pred_fallthru
        _
      // Predicated region
      $region21: #{se_dense_layer_forward.1} parent=11 // pred_check
        %p300 = pneg %p106
      $region22: #{se_dense_layer_forward.1} parent=11 // pred_check_branch
        %302 = sbr.rel (%p300) target = $region24
      $region23: #{se_dense_layer_forward.1} parent=11 // pred_region
        _
      $region24: #{se_dense_layer_forward.1} parent=11 // pred_fallthru
        _
      // Predicated region
      $region25: #{se_dense_layer_forward.1} parent=11 // pred_check
        %p303 = pneg %p127
      $region26: #{se_dense_layer_forward.1} parent=11 // pred_check_branch
        %305 = sbr.rel (%p303) target = $region28
      $region27: #{se_dense_layer_forward.1} parent=11 // pred_region
        _
      $region28: #{se_dense_layer_forward.1} parent=11 // pred_fallthru
        _
      // Predicated region
      $region29: #{se_dense_layer_forward.1} parent=11 // pred_check
        %p306 = pneg %p148
      $region30: #{se_dense_layer_forward.1} parent=11 // pred_check_branch
        %308 = sbr.rel (%p306) target = $region32
      $region31: #{se_dense_layer_forward.1} parent=11 // pred_region
        _
      $region32: #{se_dense_layer_forward.1} parent=11 // pred_fallthru
        _
      // Predicated region
      $region33: #{se_dense_layer_forward.1} parent=11 // pred_check
        %p309 = pneg %p169
      $region34: #{se_dense_layer_forward.1} parent=11 // pred_check_branch
        %311 = sbr.rel (%p309) target = $region36
      $region35: #{se_dense_layer_forward.1} parent=11 // pred_region
        _
      $region36: #{se_dense_layer_forward.1} parent=11 // pred_fallthru
        _
      // Predicated region
      $region37: #{se_dense_layer_forward.1} parent=11 // pred_check
        %p312 = pneg %p190
      $region38: #{se_dense_layer_forward.1} parent=11 // pred_check_branch
        %314 = sbr.rel (%p312) target = $region40
      $region39: #{se_dense_layer_forward.1} parent=11 // pred_region
        _
      $region40: #{se_dense_layer_forward.1} parent=11 // pred_fallthru
        _
      // Predicated region
      $region41: #{se_dense_layer_forward.1} parent=11 // pred_check
        %p315 = pneg %p211
      $region42: #{se_dense_layer_forward.1} parent=11 // pred_check_branch
        %317 = sbr.rel (%p315) target = $region44
      $region43: #{se_dense_layer_forward.1} parent=11 // pred_region
        _
      $region44: #{se_dense_layer_forward.1} parent=11 // pred_fallthru
        _
      // Predicated region
      $region45: #{se_dense_layer_forward.1} parent=11 // pred_check
        %p318 = pneg %p232
      $region46: #{se_dense_layer_forward.1} parent=11 // pred_check_branch
        %320 = sbr.rel (%p318) target = $region48
      $region47: #{se_dense_layer_forward.1} parent=11 // pred_region
        _
      $region48: #{se_dense_layer_forward.1} parent=11 // pred_fallthru
        _
      // Predicated region
      $region49: #{se_dense_layer_forward.1} parent=11 // pred_check
        %p321 = pneg %p253
      $region50: #{se_dense_layer_forward.1} parent=11 // pred_check_branch
        %323 = sbr.rel (%p321) target = $region52
      $region51: #{se_dense_layer_forward.1} parent=11 // pred_region
        _
      $region52: #{se_dense_layer_forward.1} parent=11 // pred_fallthru
        _
    $region12: #{se_dense_layer_forward.1} parent=5 // pred_fallthru
      _
    %p324 = scmp.lt.s32.totalorder %s17, 2
    // Predicated region
    $region53: #{se_dense_layer_forward.1} parent=5 // pred_check
      %p325 = pneg %p324
    $region54: #{se_dense_layer_forward.1} parent=5 // pred_check_branch
      %327 = sbr.rel (%p325) target = $region56
    $region55: #{se_dense_layer_forward.1} parent=5 // pred_region
      // Predicated region
      $region57: #{se_dense_layer_forward.1} parent=55 // pred_check
        %p328 = pneg %p37
      $region58: #{se_dense_layer_forward.1} parent=55 // pred_check_branch
        %330 = sbr.rel (%p328) target = $region60
      $region59: #{se_dense_layer_forward.1} parent=55 // pred_region
        %p331 = scmp.lt.s32.totalorder %s17, 1
        %s332 = scalar_select %p331, %s17, 1
        %s333 = smul.addr %s332, 8
        %s334 = smul.addr %s333, 8
        %s335 = scalar_lea.vmem %s0, %s334
      $region60: #{se_dense_layer_forward.1} parent=55 // pred_fallthru
        _
    $region56: #{se_dense_layer_forward.1} parent=5 // pred_fallthru
      _
    %p336 = scmp.le.s32.totalorder 1, %s17
    %p337 = scmp.lt.s32.totalorder %s17, 3
    %p338 = pnand %p336, %p337
    %p339 = pneg %p338
    // Predicated region
    $region61: #{se_dense_layer_forward.1} parent=5 // pred_check
      _
    $region62: #{se_dense_layer_forward.1} parent=5 // pred_check_branch
      %341 = sbr.rel (%p338) target = $region64
    $region63: #{se_dense_layer_forward.1} parent=5 // pred_region
      %s342 = ssub.s32 %s17, 1
      %p343 = scmp.lt.s32.totalorder %s22, 1
      %s344 = scalar_select %p343, %s22, 1
      %s345 = smul.addr %s344, 8
      %s346 = smul.addr %s345, 8
      %s347 = scalar_lea.vmem %s0, %s346
      %p348 = pneg %p43
      %p349 = pneg %p40
      %p350 = pneg %p64
      %p351 = pneg %p61
      %p352 = pneg %p85
      %p353 = pneg %p82
      %p354 = pneg %p106
      %p355 = pneg %p103
      %p356 = pneg %p127
      %p357 = pneg %p124
      %p358 = pneg %p148
      %p359 = pneg %p145
      %p360 = pneg %p169
      %p361 = pneg %p166
      %p362 = pneg %p190
      %p363 = pneg %p187
      %p364 = pneg %p211
      %p365 = pneg %p208
      %p366 = pneg %p232
      %p367 = pneg %p229
      %p368 = pneg %p253
      %p369 = pneg %p250
      %p370 = pneg %p279
      %p371 = pneg %p276
      %p372 = scmp.lt.s32.totalorder %s22, 1
      %s373 = scalar_select %p372, %s22, 1
      %s374 = smul.addr %s373, 2
      %s375 = smul.addr %s374, 8
      %s376 = scalar_lea.vmem %s11, %s375
      %p377 = scmp.lt.s32.totalorder %s22, 1
      %s378 = scalar_select %p377, %s22, 1
      %s379 = smul.addr %s378, 8
      %s380 = smul.addr %s379, 8
      %s381 = scalar_lea.vmem %s0, %s380
      %p382 = scmp.lt.s32.totalorder %s22, 1
      %s383 = scalar_select %p382, %s22, 1
      %s384 = smul.addr %s383, 2
      %s385 = smul.addr %s384, 8
      %s386 = scalar_lea.vmem %s11, %s385
      %vm387 = vcmask 261120
      %388 = vst.msk [vmem:[#allocation2] sm:$0xff] %vm387, 0.0
      %389 = vst.msk [vmem:[#allocation2 + $0x18] sm:$0xff] %vm387, 0.0
      %390 = vst.msk [vmem:[#allocation2 + $0x30] sm:$0xff] %vm387, 0.0
      %391 = vst.msk [vmem:[#allocation2 + $0x48] sm:$0xff] %vm387, 0.0
      %vm392 = vcmask 523520
      %393 = vst.msk [vmem:[#allocation2 + $0x10] sm:$0xff] %vm392, 0.0
      %394 = vst.msk [vmem:[#allocation2 + $0x28] sm:$0xff] %vm392, 0.0
      %395 = vst.msk [vmem:[#allocation2 + $0x40] sm:$0xff] %vm392, 0.0
      %396 = vst.msk [vmem:[#allocation2 + $0x58] sm:$0xff] %vm392, 0.0
      %v397 = vld [vmem:[%s381] sm:$0xff]
      %v398 = vld [vmem:[%s381 + $0x8] sm:$0xff]
      %v399 = vld [vmem:[%s381 + $0x10] sm:$0xff]
      %v400 = vld [vmem:[%s381 + $0x18] sm:$0xff]
      %v401 = vld [vmem:[%s381 + $0x20] sm:$0xff]
      %v402 = vld [vmem:[%s381 + $0x28] sm:$0xff]
      %v403 = vld [vmem:[%s381 + $0x30] sm:$0xff]
      %v404 = vld [vmem:[%s381 + $0x38] sm:$0xff]
      %v405 = vadd.f32 %v397, %v398
      %406 = vadd.xlane.f32.xlu0 %v405
      %v407 = vpop.xlane.xlu0 %406
      %v408 = vadd.f32 %v399, %v400
      %409 = vadd.xlane.f32.xlu0 %v408
      %v410 = vpop.xlane.xlu0 %409
      %v411 = vadd.f32 %v401, %v402
      %412 = vadd.xlane.f32.xlu0 %v411
      %v413 = vpop.xlane.xlu0 %412
      %v414 = vadd.f32 %v403, %v404
      %415 = vadd.xlane.f32.xlu0 %v414
      %v416 = vpop.xlane.xlu0 %415
      %v417 = vmul.f32 %v407, 0.00390625
      %v418 = vmul.f32 %v410, 0.00390625
      %v419 = vmul.f32 %v413, 0.00390625
      %v420 = vmul.f32 %v416, 0.00390625
      %v421 = vld [vmem:[%s3] sm:$0x1]
      %v423 = vlaneseq
      %v424 = vshrl.u32 %v423, 7
      %v425 = vsub.s32 0, %v424
      %v426 = vrot.slane %v421, %v425
      %428 = vbcast.lane.b32.xlu0 %v426, 256
      %v429 = vpop.permute.xlu0 %428
      %s431 = sor.u32 256, 8
      %432 = vbcast.lane.b32.xlu0 %v426, %s431
      %v433 = vpop.permute.xlu0 %432
      %s435 = sor.u32 256, 16
      %436 = vbcast.lane.b32.xlu0 %v426, %s435
      %v437 = vpop.permute.xlu0 %436
      %s439 = sor.u32 256, 24
      %440 = vbcast.lane.b32.xlu0 %v426, %s439
      %v441 = vpop.permute.xlu0 %440
      %v446 = vmul.f32 %v417, %v429
      %v447 = vmul.f32 %v418, %v433
      %v448 = vmul.f32 %v419, %v437
      %v449 = vmul.f32 %v420, %v441
      %v450 = vld [vmem:[%s4] sm:$0x1]
      %v452 = vlaneseq
      %v453 = vshrl.u32 %v452, 7
      %v454 = vsub.s32 0, %v453
      %v455 = vrot.slane %v450, %v454
      %457 = vbcast.lane.b32.xlu0 %v455, 256
      %v458 = vpop.permute.xlu0 %457
      %s460 = sor.u32 256, 8
      %461 = vbcast.lane.b32.xlu0 %v455, %s460
      %v462 = vpop.permute.xlu0 %461
      %s464 = sor.u32 256, 16
      %465 = vbcast.lane.b32.xlu0 %v455, %s464
      %v466 = vpop.permute.xlu0 %465
      %s468 = sor.u32 256, 24
      %469 = vbcast.lane.b32.xlu0 %v455, %s468
      %v470 = vpop.permute.xlu0 %469
      %v475 = vadd.f32 %v446, %v458
      %v476 = vadd.f32 %v447, %v462
      %v477 = vadd.f32 %v448, %v466
      %v478 = vadd.f32 %v449, %v470
      %v479 = vld [vmem:[%s5] sm:$0x3]
      %v481 = vlaneseq
      %v482 = vshrl.u32 %v481, 7
      %v483 = vsub.s32 0, %v482
      %v484 = vrot.slane %v479, %v483
      %486 = vbcast.lane.b32.xlu0 %v484, 256
      %v487 = vpop.permute.xlu0 %486
      %s489 = sor.u32 256, 8
      %490 = vbcast.lane.b32.xlu0 %v484, %s489
      %v491 = vpop.permute.xlu0 %490
      %s493 = sor.u32 256, 16
      %494 = vbcast.lane.b32.xlu0 %v484, %s493
      %v495 = vpop.permute.xlu0 %494
      %s497 = sor.u32 256, 24
      %498 = vbcast.lane.b32.xlu0 %v484, %s497
      %v499 = vpop.permute.xlu0 %498
      %v500 = vlaneseq
      %v501 = vshrl.u32 %v500, 7
      %v502 = vsub.s32 1, %v501
      %v503 = vrot.slane %v479, %v502
      %505 = vbcast.lane.b32.xlu0 %v503, 256
      %v506 = vpop.permute.xlu0 %505
      %s508 = sor.u32 256, 8
      %509 = vbcast.lane.b32.xlu0 %v503, %s508
      %v510 = vpop.permute.xlu0 %509
      %s512 = sor.u32 256, 16
      %513 = vbcast.lane.b32.xlu0 %v503, %s512
      %v514 = vpop.permute.xlu0 %513
      %s516 = sor.u32 256, 24
      %517 = vbcast.lane.b32.xlu0 %v503, %s516
      %v518 = vpop.permute.xlu0 %517
      %v527 = vmul.f32 %v475, %v487
      %v528 = vmul.f32 %v476, %v491
      %v529 = vmul.f32 %v477, %v495
      %v530 = vmul.f32 %v478, %v499
      %v531 = vmul.f32 %v475, %v506
      %v532 = vmul.f32 %v476, %v510
      %v533 = vmul.f32 %v477, %v514
      %v534 = vmul.f32 %v478, %v518
      %543 = vset.pattern.permute.xlu0 0
      %544 = vperm.xlu0 %543, %v527
      %v545 = vpop.permute.xlu0 %544
      %546 = vset.pattern.permute.xlu0 0
      %547 = vperm.xlu0 %546, %v528
      %v548 = vpop.permute.xlu0 %547
      %549 = vset.pattern.permute.xlu0 0
      %550 = vperm.xlu0 %549, %v529
      %v551 = vpop.permute.xlu0 %550
      %552 = vset.pattern.permute.xlu0 0
      %553 = vperm.xlu0 %552, %v530
      %v554 = vpop.permute.xlu0 %553
      %555 = vset.pattern.permute.xlu0 0
      %556 = vperm.xlu0 %555, %v531
      %v557 = vpop.permute.xlu0 %556
      %558 = vset.pattern.permute.xlu0 0
      %559 = vperm.xlu0 %558, %v532
      %v560 = vpop.permute.xlu0 %559
      %561 = vset.pattern.permute.xlu0 0
      %562 = vperm.xlu0 %561, %v533
      %v563 = vpop.permute.xlu0 %562
      %564 = vset.pattern.permute.xlu0 0
      %565 = vperm.xlu0 %564, %v534
      %v566 = vpop.permute.xlu0 %565
      %v567 = vlaneseq
      %v568 = vand.u32 %v567, 127
      %v569 = vlaneseq
      %v570 = vshrl.u32 %v569, 7
      %v571 = vsub.s32 %v568, %v570
      %v572 = vrot.slane %v545, %v571
      %v573 = vadd.s32 %v568, 4294967288
      %v574 = vlaneseq
      %v575 = vshrl.u32 %v574, 7
      %v576 = vsub.s32 %v573, %v575
      %v577 = vrot.slane %v548, %v576
      %vm578 = vcmask 130112
      %v579 = vsel %vm578, %v577, %v572
      %v580 = vadd.s32 %v568, 4294967280
      %v581 = vlaneseq
      %v582 = vshrl.u32 %v581, 7
      %v583 = vsub.s32 %v580, %v582
      %v584 = vrot.slane %v551, %v583
      %vm585 = vcmask 195712
      %v586 = vsel %vm585, %v584, %v579
      %v587 = vadd.s32 %v568, 4294967272
      %v588 = vlaneseq
      %v589 = vshrl.u32 %v588, 7
      %v590 = vsub.s32 %v587, %v589
      %v591 = vrot.slane %v554, %v590
      %vm592 = vcmask 261312
      %v593 = vsel %vm592, %v591, %v586
      %v594 = vlaneseq
      %v595 = vshrl.u32 %v594, 7
      %v596 = vsub.s32 %v568, %v595
      %v597 = vrot.slane %v557, %v596
      %v598 = vlaneseq
      %v599 = vshrl.u32 %v598, 7
      %v600 = vsub.s32 %v573, %v599
      %v601 = vrot.slane %v560, %v600
      %v602 = vsel %vm578, %v601, %v597
      %v603 = vlaneseq
      %v604 = vshrl.u32 %v603, 7
      %v605 = vsub.s32 %v580, %v604
      %v606 = vrot.slane %v563, %v605
      %v607 = vsel %vm585, %v606, %v602
      %v608 = vlaneseq
      %v609 = vshrl.u32 %v608, 7
      %v610 = vsub.s32 %v587, %v609
      %v611 = vrot.slane %v566, %v610
      %v612 = vsel %vm592, %v611, %v607
      %vm613 = vcmask 1041409
      %v614 = vsel %vm613, %v612, %v593
      %vm616 = vcmask 254976
      %v617 = vsel %vm616, %v614, 0.0
      %618 = vadd.xlane.f32.xlu0 %v617
      %v619 = vpop.xlane.xlu0 %618
      %v620 = vmax.f32 %v619, 0.0
      %v621 = vld [vmem:[%s6] sm:$0xff]
      %v622 = vld [vmem:[%s6 + $0x8] sm:$0xff]
      %v623 = vld [vmem:[%s6 + $0x10] sm:$0xff]
      %v624 = vld [vmem:[%s6 + $0x18] sm:$0xff]
      %v629 = vlaneseq
      %v630 = vshrl.u32 %v629, 7
      %v631 = vsub.s32 0, %v630
      %v632 = vrot.slane %v621, %v631
      %634 = vbcast.lane.b32.xlu0 %v632, 256
      %v635 = vpop.permute.xlu0 %634
      %v636 = vlaneseq
      %v637 = vshrl.u32 %v636, 7
      %v638 = vsub.s32 1, %v637
      %v639 = vrot.slane %v621, %v638
      %641 = vbcast.lane.b32.xlu0 %v639, 256
      %v642 = vpop.permute.xlu0 %641
      %v643 = vlaneseq
      %v644 = vshrl.u32 %v643, 7
      %v645 = vsub.s32 2, %v644
      %v646 = vrot.slane %v621, %v645
      %648 = vbcast.lane.b32.xlu0 %v646, 256
      %v649 = vpop.permute.xlu0 %648
      %v650 = vlaneseq
      %v651 = vshrl.u32 %v650, 7
      %v652 = vsub.s32 3, %v651
      %v653 = vrot.slane %v621, %v652
      %655 = vbcast.lane.b32.xlu0 %v653, 256
      %v656 = vpop.permute.xlu0 %655
      %v657 = vlaneseq
      %v658 = vshrl.u32 %v657, 7
      %v659 = vsub.s32 4, %v658
      %v660 = vrot.slane %v621, %v659
      %662 = vbcast.lane.b32.xlu0 %v660, 256
      %v663 = vpop.permute.xlu0 %662
      %v664 = vlaneseq
      %v665 = vshrl.u32 %v664, 7
      %v666 = vsub.s32 5, %v665
      %v667 = vrot.slane %v621, %v666
      %669 = vbcast.lane.b32.xlu0 %v667, 256
      %v670 = vpop.permute.xlu0 %669
      %v671 = vlaneseq
      %v672 = vshrl.u32 %v671, 7
      %v673 = vsub.s32 6, %v672
      %v674 = vrot.slane %v621, %v673
      %676 = vbcast.lane.b32.xlu0 %v674, 256
      %v677 = vpop.permute.xlu0 %676
      %v678 = vlaneseq
      %v679 = vshrl.u32 %v678, 7
      %v680 = vsub.s32 7, %v679
      %v681 = vrot.slane %v621, %v680
      %683 = vbcast.lane.b32.xlu0 %v681, 256
      %v684 = vpop.permute.xlu0 %683
      %v685 = vlaneseq
      %v686 = vshrl.u32 %v685, 7
      %v687 = vsub.s32 0, %v686
      %v688 = vrot.slane %v622, %v687
      %690 = vbcast.lane.b32.xlu0 %v688, 256
      %v691 = vpop.permute.xlu0 %690
      %v692 = vlaneseq
      %v693 = vshrl.u32 %v692, 7
      %v694 = vsub.s32 1, %v693
      %v695 = vrot.slane %v622, %v694
      %697 = vbcast.lane.b32.xlu0 %v695, 256
      %v698 = vpop.permute.xlu0 %697
      %v699 = vlaneseq
      %v700 = vshrl.u32 %v699, 7
      %v701 = vsub.s32 2, %v700
      %v702 = vrot.slane %v622, %v701
      %704 = vbcast.lane.b32.xlu0 %v702, 256
      %v705 = vpop.permute.xlu0 %704
      %v706 = vlaneseq
      %v707 = vshrl.u32 %v706, 7
      %v708 = vsub.s32 3, %v707
      %v709 = vrot.slane %v622, %v708
      %711 = vbcast.lane.b32.xlu0 %v709, 256
      %v712 = vpop.permute.xlu0 %711
      %v713 = vlaneseq
      %v714 = vshrl.u32 %v713, 7
      %v715 = vsub.s32 4, %v714
      %v716 = vrot.slane %v622, %v715
      %718 = vbcast.lane.b32.xlu0 %v716, 256
      %v719 = vpop.permute.xlu0 %718
      %v720 = vlaneseq
      %v721 = vshrl.u32 %v720, 7
      %v722 = vsub.s32 5, %v721
      %v723 = vrot.slane %v622, %v722
      %725 = vbcast.lane.b32.xlu0 %v723, 256
      %v726 = vpop.permute.xlu0 %725
      %v727 = vlaneseq
      %v728 = vshrl.u32 %v727, 7
      %v729 = vsub.s32 6, %v728
      %v730 = vrot.slane %v622, %v729
      %732 = vbcast.lane.b32.xlu0 %v730, 256
      %v733 = vpop.permute.xlu0 %732
      %v734 = vlaneseq
      %v735 = vshrl.u32 %v734, 7
      %v736 = vsub.s32 7, %v735
      %v737 = vrot.slane %v622, %v736
      %739 = vbcast.lane.b32.xlu0 %v737, 256
      %v740 = vpop.permute.xlu0 %739
      %v741 = vlaneseq
      %v742 = vshrl.u32 %v741, 7
      %v743 = vsub.s32 0, %v742
      %v744 = vrot.slane %v623, %v743
      %746 = vbcast.lane.b32.xlu0 %v744, 256
      %v747 = vpop.permute.xlu0 %746
      %v748 = vlaneseq
      %v749 = vshrl.u32 %v748, 7
      %v750 = vsub.s32 1, %v749
      %v751 = vrot.slane %v623, %v750
      %753 = vbcast.lane.b32.xlu0 %v751, 256
      %v754 = vpop.permute.xlu0 %753
      %v755 = vlaneseq
      %v756 = vshrl.u32 %v755, 7
      %v757 = vsub.s32 2, %v756
      %v758 = vrot.slane %v623, %v757
      %760 = vbcast.lane.b32.xlu0 %v758, 256
      %v761 = vpop.permute.xlu0 %760
      %v762 = vlaneseq
      %v763 = vshrl.u32 %v762, 7
      %v764 = vsub.s32 3, %v763
      %v765 = vrot.slane %v623, %v764
      %767 = vbcast.lane.b32.xlu0 %v765, 256
      %v768 = vpop.permute.xlu0 %767
      %v769 = vlaneseq
      %v770 = vshrl.u32 %v769, 7
      %v771 = vsub.s32 4, %v770
      %v772 = vrot.slane %v623, %v771
      %774 = vbcast.lane.b32.xlu0 %v772, 256
      %v775 = vpop.permute.xlu0 %774
      %v776 = vlaneseq
      %v777 = vshrl.u32 %v776, 7
      %v778 = vsub.s32 5, %v777
      %v779 = vrot.slane %v623, %v778
      %781 = vbcast.lane.b32.xlu0 %v779, 256
      %v782 = vpop.permute.xlu0 %781
      %v783 = vlaneseq
      %v784 = vshrl.u32 %v783, 7
      %v785 = vsub.s32 6, %v784
      %v786 = vrot.slane %v623, %v785
      %788 = vbcast.lane.b32.xlu0 %v786, 256
      %v789 = vpop.permute.xlu0 %788
      %v790 = vlaneseq
      %v791 = vshrl.u32 %v790, 7
      %v792 = vsub.s32 7, %v791
      %v793 = vrot.slane %v623, %v792
      %795 = vbcast.lane.b32.xlu0 %v793, 256
      %v796 = vpop.permute.xlu0 %795
      %v797 = vlaneseq
      %v798 = vshrl.u32 %v797, 7
      %v799 = vsub.s32 0, %v798
      %v800 = vrot.slane %v624, %v799
      %802 = vbcast.lane.b32.xlu0 %v800, 256
      %v803 = vpop.permute.xlu0 %802
      %v804 = vlaneseq
      %v805 = vshrl.u32 %v804, 7
      %v806 = vsub.s32 1, %v805
      %v807 = vrot.slane %v624, %v806
      %809 = vbcast.lane.b32.xlu0 %v807, 256
      %v810 = vpop.permute.xlu0 %809
      %v811 = vlaneseq
      %v812 = vshrl.u32 %v811, 7
      %v813 = vsub.s32 2, %v812
      %v814 = vrot.slane %v624, %v813
      %816 = vbcast.lane.b32.xlu0 %v814, 256
      %v817 = vpop.permute.xlu0 %816
      %v818 = vlaneseq
      %v819 = vshrl.u32 %v818, 7
      %v820 = vsub.s32 3, %v819
      %v821 = vrot.slane %v624, %v820
      %823 = vbcast.lane.b32.xlu0 %v821, 256
      %v824 = vpop.permute.xlu0 %823
      %v825 = vlaneseq
      %v826 = vshrl.u32 %v825, 7
      %v827 = vsub.s32 4, %v826
      %v828 = vrot.slane %v624, %v827
      %830 = vbcast.lane.b32.xlu0 %v828, 256
      %v831 = vpop.permute.xlu0 %830
      %v832 = vlaneseq
      %v833 = vshrl.u32 %v832, 7
      %v834 = vsub.s32 5, %v833
      %v835 = vrot.slane %v624, %v834
      %837 = vbcast.lane.b32.xlu0 %v835, 256
      %v838 = vpop.permute.xlu0 %837
      %v839 = vlaneseq
      %v840 = vshrl.u32 %v839, 7
      %v841 = vsub.s32 6, %v840
      %v842 = vrot.slane %v624, %v841
      %844 = vbcast.lane.b32.xlu0 %v842, 256
      %v845 = vpop.permute.xlu0 %844
      %v846 = vlaneseq
      %v847 = vshrl.u32 %v846, 7
      %v848 = vsub.s32 7, %v847
      %v849 = vrot.slane %v624, %v848
      %851 = vbcast.lane.b32.xlu0 %v849, 256
      %v852 = vpop.permute.xlu0 %851
      %v885 = vmul.f32 %v620, %v635
      %v886 = vmul.f32 %v620, %v642
      %v887 = vmul.f32 %v620, %v649
      %v888 = vmul.f32 %v620, %v656
      %v889 = vmul.f32 %v620, %v663
      %v890 = vmul.f32 %v620, %v670
      %v891 = vmul.f32 %v620, %v677
      %v892 = vmul.f32 %v620, %v684
      %v893 = vmul.f32 %v620, %v691
      %v894 = vmul.f32 %v620, %v698
      %v895 = vmul.f32 %v620, %v705
      %v896 = vmul.f32 %v620, %v712
      %v897 = vmul.f32 %v620, %v719
      %v898 = vmul.f32 %v620, %v726
      %v899 = vmul.f32 %v620, %v733
      %v900 = vmul.f32 %v620, %v740
      %v901 = vmul.f32 %v620, %v747
      %v902 = vmul.f32 %v620, %v754
      %v903 = vmul.f32 %v620, %v761
      %v904 = vmul.f32 %v620, %v768
      %v905 = vmul.f32 %v620, %v775
      %v906 = vmul.f32 %v620, %v782
      %v907 = vmul.f32 %v620, %v789
      %v908 = vmul.f32 %v620, %v796
      %v909 = vmul.f32 %v620, %v803
      %v910 = vmul.f32 %v620, %v810
      %v911 = vmul.f32 %v620, %v817
      %v912 = vmul.f32 %v620, %v824
      %v913 = vmul.f32 %v620, %v831
      %v914 = vmul.f32 %v620, %v838
      %v915 = vmul.f32 %v620, %v845
      %v916 = vmul.f32 %v620, %v852
      %949 = vset.pattern.permute.xlu0 0
      %950 = vperm.xlu0 %949, %v885
      %v951 = vpop.permute.xlu0 %950
      %952 = vset.pattern.permute.xlu0 0
      %953 = vperm.xlu0 %952, %v886
      %v954 = vpop.permute.xlu0 %953
      %955 = vset.pattern.permute.xlu0 0
      %956 = vperm.xlu0 %955, %v887
      %v957 = vpop.permute.xlu0 %956
      %958 = vset.pattern.permute.xlu0 0
      %959 = vperm.xlu0 %958, %v888
      %v960 = vpop.permute.xlu0 %959
      %961 = vset.pattern.permute.xlu0 0
      %962 = vperm.xlu0 %961, %v889
      %v963 = vpop.permute.xlu0 %962
      %964 = vset.pattern.permute.xlu0 0
      %965 = vperm.xlu0 %964, %v890
      %v966 = vpop.permute.xlu0 %965
      %967 = vset.pattern.permute.xlu0 0
      %968 = vperm.xlu0 %967, %v891
      %v969 = vpop.permute.xlu0 %968
      %970 = vset.pattern.permute.xlu0 0
      %971 = vperm.xlu0 %970, %v892
      %v972 = vpop.permute.xlu0 %971
      %973 = vset.pattern.permute.xlu0 0
      %974 = vperm.xlu0 %973, %v893
      %v975 = vpop.permute.xlu0 %974
      %976 = vset.pattern.permute.xlu0 0
      %977 = vperm.xlu0 %976, %v894
      %v978 = vpop.permute.xlu0 %977
      %979 = vset.pattern.permute.xlu0 0
      %980 = vperm.xlu0 %979, %v895
      %v981 = vpop.permute.xlu0 %980
      %982 = vset.pattern.permute.xlu0 0
      %983 = vperm.xlu0 %982, %v896
      %v984 = vpop.permute.xlu0 %983
      %985 = vset.pattern.permute.xlu0 0
      %986 = vperm.xlu0 %985, %v897
      %v987 = vpop.permute.xlu0 %986
      %988 = vset.pattern.permute.xlu0 0
      %989 = vperm.xlu0 %988, %v898
      %v990 = vpop.permute.xlu0 %989
      %991 = vset.pattern.permute.xlu0 0
      %992 = vperm.xlu0 %991, %v899
      %v993 = vpop.permute.xlu0 %992
      %994 = vset.pattern.permute.xlu0 0
      %995 = vperm.xlu0 %994, %v900
      %v996 = vpop.permute.xlu0 %995
      %997 = vset.pattern.permute.xlu0 0
      %998 = vperm.xlu0 %997, %v901
      %v999 = vpop.permute.xlu0 %998
      %1000 = vset.pattern.permute.xlu0 0
      %1001 = vperm.xlu0 %1000, %v902
      %v1002 = vpop.permute.xlu0 %1001
      %1003 = vset.pattern.permute.xlu0 0
      %1004 = vperm.xlu0 %1003, %v903
      %v1005 = vpop.permute.xlu0 %1004
      %1006 = vset.pattern.permute.xlu0 0
      %1007 = vperm.xlu0 %1006, %v904
      %v1008 = vpop.permute.xlu0 %1007
      %1009 = vset.pattern.permute.xlu0 0
      %1010 = vperm.xlu0 %1009, %v905
      %v1011 = vpop.permute.xlu0 %1010
      %1012 = vset.pattern.permute.xlu0 0
      %1013 = vperm.xlu0 %1012, %v906
      %v1014 = vpop.permute.xlu0 %1013
      %1015 = vset.pattern.permute.xlu0 0
      %1016 = vperm.xlu0 %1015, %v907
      %v1017 = vpop.permute.xlu0 %1016
      %1018 = vset.pattern.permute.xlu0 0
      %1019 = vperm.xlu0 %1018, %v908
      %v1020 = vpop.permute.xlu0 %1019
      %1021 = vset.pattern.permute.xlu0 0
      %1022 = vperm.xlu0 %1021, %v909
      %v1023 = vpop.permute.xlu0 %1022
      %1024 = vset.pattern.permute.xlu0 0
      %1025 = vperm.xlu0 %1024, %v910
      %v1026 = vpop.permute.xlu0 %1025
      %1027 = vset.pattern.permute.xlu0 0
      %1028 = vperm.xlu0 %1027, %v911
      %v1029 = vpop.permute.xlu0 %1028
      %1030 = vset.pattern.permute.xlu0 0
      %1031 = vperm.xlu0 %1030, %v912
      %v1032 = vpop.permute.xlu0 %1031
      %1033 = vset.pattern.permute.xlu0 0
      %1034 = vperm.xlu0 %1033, %v913
      %v1035 = vpop.permute.xlu0 %1034
      %1036 = vset.pattern.permute.xlu0 0
      %1037 = vperm.xlu0 %1036, %v914
      %v1038 = vpop.permute.xlu0 %1037
      %1039 = vset.pattern.permute.xlu0 0
      %1040 = vperm.xlu0 %1039, %v915
      %v1041 = vpop.permute.xlu0 %1040
      %1042 = vset.pattern.permute.xlu0 0
      %1043 = vperm.xlu0 %1042, %v916
      %v1044 = vpop.permute.xlu0 %1043
      %v1045 = vlaneseq
      %v1046 = vshrl.u32 %v1045, 7
      %v1047 = vsub.s32 %v568, %v1046
      %v1048 = vrot.slane %v951, %v1047
      %v1049 = vlaneseq
      %v1050 = vshrl.u32 %v1049, 7
      %v1051 = vsub.s32 %v568, %v1050
      %v1052 = vrot.slane %v954, %v1051
      %v1053 = vlaneseq
      %v1054 = vshrl.u32 %v1053, 7
      %v1055 = vsub.s32 %v568, %v1054
      %v1056 = vrot.slane %v957, %v1055
      %v1057 = vlaneseq
      %v1058 = vshrl.u32 %v1057, 7
      %v1059 = vsub.s32 %v568, %v1058
      %v1060 = vrot.slane %v960, %v1059
      %v1061 = vlaneseq
      %v1062 = vshrl.u32 %v1061, 7
      %v1063 = vsub.s32 %v568, %v1062
      %v1064 = vrot.slane %v963, %v1063
      %v1065 = vlaneseq
      %v1066 = vshrl.u32 %v1065, 7
      %v1067 = vsub.s32 %v568, %v1066
      %v1068 = vrot.slane %v966, %v1067
      %v1069 = vlaneseq
      %v1070 = vshrl.u32 %v1069, 7
      %v1071 = vsub.s32 %v568, %v1070
      %v1072 = vrot.slane %v969, %v1071
      %v1073 = vlaneseq
      %v1074 = vshrl.u32 %v1073, 7
      %v1075 = vsub.s32 %v568, %v1074
      %v1076 = vrot.slane %v972, %v1075
      %v1077 = vlaneseq
      %v1078 = vshrl.u32 %v1077, 7
      %v1079 = vsub.s32 %v568, %v1078
      %v1080 = vrot.slane %v975, %v1079
      %v1081 = vlaneseq
      %v1082 = vshrl.u32 %v1081, 7
      %v1083 = vsub.s32 %v568, %v1082
      %v1084 = vrot.slane %v978, %v1083
      %v1085 = vlaneseq
      %v1086 = vshrl.u32 %v1085, 7
      %v1087 = vsub.s32 %v568, %v1086
      %v1088 = vrot.slane %v981, %v1087
      %v1089 = vlaneseq
      %v1090 = vshrl.u32 %v1089, 7
      %v1091 = vsub.s32 %v568, %v1090
      %v1092 = vrot.slane %v984, %v1091
      %v1093 = vlaneseq
      %v1094 = vshrl.u32 %v1093, 7
      %v1095 = vsub.s32 %v568, %v1094
      %v1096 = vrot.slane %v987, %v1095
      %v1097 = vlaneseq
      %v1098 = vshrl.u32 %v1097, 7
      %v1099 = vsub.s32 %v568, %v1098
      %v1100 = vrot.slane %v990, %v1099
      %v1101 = vlaneseq
      %v1102 = vshrl.u32 %v1101, 7
      %v1103 = vsub.s32 %v568, %v1102
      %v1104 = vrot.slane %v993, %v1103
      %v1105 = vlaneseq
      %v1106 = vshrl.u32 %v1105, 7
      %v1107 = vsub.s32 %v568, %v1106
      %v1108 = vrot.slane %v996, %v1107
      %v1109 = vlaneseq
      %v1110 = vshrl.u32 %v1109, 7
      %v1111 = vsub.s32 %v568, %v1110
      %v1112 = vrot.slane %v999, %v1111
      %v1113 = vlaneseq
      %v1114 = vshrl.u32 %v1113, 7
      %v1115 = vsub.s32 %v568, %v1114
      %v1116 = vrot.slane %v1002, %v1115
      %v1117 = vlaneseq
      %v1118 = vshrl.u32 %v1117, 7
      %v1119 = vsub.s32 %v568, %v1118
      %v1120 = vrot.slane %v1005, %v1119
      %v1121 = vlaneseq
      %v1122 = vshrl.u32 %v1121, 7
      %v1123 = vsub.s32 %v568, %v1122
      %v1124 = vrot.slane %v1008, %v1123
      %v1125 = vlaneseq
      %v1126 = vshrl.u32 %v1125, 7
      %v1127 = vsub.s32 %v568, %v1126
      %v1128 = vrot.slane %v1011, %v1127
      %v1129 = vlaneseq
      %v1130 = vshrl.u32 %v1129, 7
      %v1131 = vsub.s32 %v568, %v1130
      %v1132 = vrot.slane %v1014, %v1131
      %v1133 = vlaneseq
      %v1134 = vshrl.u32 %v1133, 7
      %v1135 = vsub.s32 %v568, %v1134
      %v1136 = vrot.slane %v1017, %v1135
      %v1137 = vlaneseq
      %v1138 = vshrl.u32 %v1137, 7
      %v1139 = vsub.s32 %v568, %v1138
      %v1140 = vrot.slane %v1020, %v1139
      %v1141 = vlaneseq
      %v1142 = vshrl.u32 %v1141, 7
      %v1143 = vsub.s32 %v568, %v1142
      %v1144 = vrot.slane %v1023, %v1143
      %v1145 = vlaneseq
      %v1146 = vshrl.u32 %v1145, 7
      %v1147 = vsub.s32 %v568, %v1146
      %v1148 = vrot.slane %v1026, %v1147
      %v1149 = vlaneseq
      %v1150 = vshrl.u32 %v1149, 7
      %v1151 = vsub.s32 %v568, %v1150
      %v1152 = vrot.slane %v1029, %v1151
      %v1153 = vlaneseq
      %v1154 = vshrl.u32 %v1153, 7
      %v1155 = vsub.s32 %v568, %v1154
      %v1156 = vrot.slane %v1032, %v1155
      %v1157 = vlaneseq
      %v1158 = vshrl.u32 %v1157, 7
      %v1159 = vsub.s32 %v568, %v1158
      %v1160 = vrot.slane %v1035, %v1159
      %v1161 = vlaneseq
      %v1162 = vshrl.u32 %v1161, 7
      %v1163 = vsub.s32 %v568, %v1162
      %v1164 = vrot.slane %v1038, %v1163
      %v1165 = vlaneseq
      %v1166 = vshrl.u32 %v1165, 7
      %v1167 = vsub.s32 %v568, %v1166
      %v1168 = vrot.slane %v1041, %v1167
      %v1169 = vlaneseq
      %v1170 = vshrl.u32 %v1169, 7
      %v1171 = vsub.s32 %v568, %v1170
      %v1172 = vrot.slane %v1044, %v1171
      %v1173 = vsel %vm613, %v1052, %v1048
      %vm1174 = vcmask 1042434
      %v1175 = vsel %vm1174, %v1056, %v1173
      %vm1176 = vcmask 1043459
      %v1177 = vsel %vm1176, %v1060, %v1175
      %vm1178 = vcmask 1044484
      %v1179 = vsel %vm1178, %v1064, %v1177
      %vm1180 = vcmask 1045509
      %v1181 = vsel %vm1180, %v1068, %v1179
      %vm1182 = vcmask 1046534
      %v1183 = vsel %vm1182, %v1072, %v1181
      %vm1184 = vcmask 1047559
      %v1185 = vsel %vm1184, %v1076, %v1183
      %v1186 = vsel %vm613, %v1084, %v1080
      %v1187 = vsel %vm1174, %v1088, %v1186
      %v1188 = vsel %vm1176, %v1092, %v1187
      %v1189 = vsel %vm1178, %v1096, %v1188
      %v1190 = vsel %vm1180, %v1100, %v1189
      %v1191 = vsel %vm1182, %v1104, %v1190
      %v1192 = vsel %vm1184, %v1108, %v1191
      %v1193 = vsel %vm613, %v1116, %v1112
      %v1194 = vsel %vm1174, %v1120, %v1193
      %v1195 = vsel %vm1176, %v1124, %v1194
      %v1196 = vsel %vm1178, %v1128, %v1195
      %v1197 = vsel %vm1180, %v1132, %v1196
      %v1198 = vsel %vm1182, %v1136, %v1197
      %v1199 = vsel %vm1184, %v1140, %v1198
      %v1200 = vsel %vm613, %v1148, %v1144
      %v1201 = vsel %vm1174, %v1152, %v1200
      %v1202 = vsel %vm1176, %v1156, %v1201
      %v1203 = vsel %vm1178, %v1160, %v1202
      %v1204 = vsel %vm1180, %v1164, %v1203
      %v1205 = vsel %vm1182, %v1168, %v1204
      %v1206 = vsel %vm1184, %v1172, %v1205
      %vm1211 = vcmask 15360
      %v1212 = vsel %vm1211, %v1185, 0.0
      %1213 = vadd.xlane.f32.xlu0 %v1212
      %v1214 = vpop.xlane.xlu0 %1213
      %v1215 = vsel %vm1211, %v1192, 0.0
      %1216 = vadd.xlane.f32.xlu0 %v1215
      %v1217 = vpop.xlane.xlu0 %1216
      %v1218 = vsel %vm1211, %v1199, 0.0
      %1219 = vadd.xlane.f32.xlu0 %v1218
      %v1220 = vpop.xlane.xlu0 %1219
      %v1221 = vsel %vm1211, %v1206, 0.0
      %1222 = vadd.xlane.f32.xlu0 %v1221
      %v1223 = vpop.xlane.xlu0 %1222
      %v1224 = vsub.f32 0.0, %v1214
      %v1225 = vsub.f32 0.0, %v1217
      %v1226 = vsub.f32 0.0, %v1220
      %v1227 = vsub.f32 0.0, %v1223
      %v1228 = vmul.f32 %v1224, 1.442695
      %v1229 = vpow.pop %v1228
      %v1230 = vmul.f32 %v1225, 1.442695
      %v1231 = vpow.pop %v1230
      %v1232 = vmul.f32 %v1226, 1.442695
      %v1233 = vpow.pop %v1232
      %v1234 = vmul.f32 %v1227, 1.442695
      %v1235 = vpow.pop %v1234
      %v1236 = vadd.f32 %v1229, 1.0
      %v1237 = vadd.f32 %v1231, 1.0
      %v1238 = vadd.f32 %v1233, 1.0
      %v1239 = vadd.f32 %v1235, 1.0
      %v1240 = vrcp.pop %v1236
      %v1241 = vmul.f32 1.0, %v1240
      %v1242 = vrcp.pop %v1237
      %v1243 = vmul.f32 1.0, %v1242
      %v1244 = vrcp.pop %v1238
      %v1245 = vmul.f32 1.0, %v1244
      %v1246 = vrcp.pop %v1239
      %v1247 = vmul.f32 1.0, %v1246
      %v1248 = vld [vmem:[%s10] ss:$2 sm:$0x3]
      %s1249 = scalar_lea.vmem %s10, 1
      %v1250 = vld [vmem:[%s1249] ss:$2 sm:$0x3]
      %v1251 = vld [vmem:[%s1] sm:$0xff]
      %v1252 = vld [vmem:[%s1 + $0x8] sm:$0xff]
      %v1253 = vld [vmem:[%s1 + $0x10] sm:$0xff]
      %v1254 = vld [vmem:[%s1 + $0x18] sm:$0xff]
      %1256 = vset.pattern.permute.xlu0 0
      %1257 = vperm.xlu0 %1256, %v1251
      %v1258 = vpop.permute.xlu0 %1257
      %1261 = vset.pattern.permute.xlu0 0
      %1262 = vperm.xlu0 %1261, %v1252
      %v1263 = vpop.permute.xlu0 %1262
      %1266 = vset.pattern.permute.xlu0 0
      %1267 = vperm.xlu0 %1266, %v1253
      %v1268 = vpop.permute.xlu0 %1267
      %1271 = vset.pattern.permute.xlu0 0
      %1272 = vperm.xlu0 %1271, %v1254
      %v1273 = vpop.permute.xlu0 %1272
      %v1275 = vmul.f32 %v397, %v1258
      %v1276 = vmul.f32 %v398, %v1258
      %v1277 = vmul.f32 %v399, %v1263
      %v1278 = vmul.f32 %v400, %v1263
      %v1279 = vmul.f32 %v401, %v1268
      %v1280 = vmul.f32 %v402, %v1268
      %v1281 = vmul.f32 %v403, %v1273
      %v1282 = vmul.f32 %v404, %v1273
      %v1283 = vld [vmem:[%s2] sm:$0xff]
      %v1284 = vld [vmem:[%s2 + $0x8] sm:$0xff]
      %v1285 = vld [vmem:[%s2 + $0x10] sm:$0xff]
      %v1286 = vld [vmem:[%s2 + $0x18] sm:$0xff]
      %1288 = vset.pattern.permute.xlu0 0
      %1289 = vperm.xlu0 %1288, %v1283
      %v1290 = vpop.permute.xlu0 %1289
      %1293 = vset.pattern.permute.xlu0 0
      %1294 = vperm.xlu0 %1293, %v1284
      %v1295 = vpop.permute.xlu0 %1294
      %1298 = vset.pattern.permute.xlu0 0
      %1299 = vperm.xlu0 %1298, %v1285
      %v1300 = vpop.permute.xlu0 %1299
      %1303 = vset.pattern.permute.xlu0 0
      %1304 = vperm.xlu0 %1303, %v1286
      %v1305 = vpop.permute.xlu0 %1304
      %v1307 = vadd.f32 %v1275, %v1290
      %v1308 = vadd.f32 %v1276, %v1290
      %v1309 = vadd.f32 %v1277, %v1295
      %v1310 = vadd.f32 %v1278, %v1295
      %v1311 = vadd.f32 %v1279, %v1300
      %v1312 = vadd.f32 %v1280, %v1300
      %v1313 = vadd.f32 %v1281, %v1305
      %v1314 = vadd.f32 %v1282, %v1305
      %v1315 = vmax.f32 %v1307, 0.0
      %v1316 = vmax.f32 %v1308, 0.0
      %v1317 = vmax.f32 %v1309, 0.0
      %v1318 = vmax.f32 %v1310, 0.0
      %v1319 = vmax.f32 %v1311, 0.0
      %v1320 = vmax.f32 %v1312, 0.0
      %v1321 = vmax.f32 %v1313, 0.0
      %v1322 = vmax.f32 %v1314, 0.0
      %v1323 = vld [vmem:[%s7] sm:$0xff]
      %v1324 = vld [vmem:[%s7 + $0x8] sm:$0xff]
      %v1325 = vld [vmem:[%s7 + $0x10] sm:$0xff]
      %v1326 = vld [vmem:[%s7 + $0x18] sm:$0xff]
      %v1331 = vlaneseq
      %v1332 = vshrl.u32 %v1331, 7
      %v1333 = vsub.s32 %v568, %v1332
      %v1334 = vrot.slane %v1241, %v1333
      %v1335 = vlaneseq
      %v1336 = vshrl.u32 %v1335, 7
      %v1337 = vsub.s32 %v573, %v1336
      %v1338 = vrot.slane %v1243, %v1337
      %v1339 = vsel %vm578, %v1338, %v1334
      %v1340 = vlaneseq
      %v1341 = vshrl.u32 %v1340, 7
      %v1342 = vsub.s32 %v580, %v1341
      %v1343 = vrot.slane %v1245, %v1342
      %v1344 = vsel %vm585, %v1343, %v1339
      %v1345 = vlaneseq
      %v1346 = vshrl.u32 %v1345, 7
      %v1347 = vsub.s32 %v587, %v1346
      %v1348 = vrot.slane %v1247, %v1347
      %v1349 = vsel %vm592, %v1348, %v1344
      %v1350 = vsel %vm1174, %v1349, %v1349
      %v1351 = vsel %vm1176, %v1349, %v1350
      %v1352 = vsel %vm1178, %v1349, %v1351
      %v1353 = vsel %vm1180, %v1349, %v1352
      %v1354 = vsel %vm1182, %v1349, %v1353
      %v1355 = vsel %vm1184, %v1349, %v1354
      %v1357 = vmul.f32 %v1323, %v1355
      %v1358 = vmul.f32 %v1324, %v1355
      %v1359 = vmul.f32 %v1325, %v1355
      %v1360 = vmul.f32 %v1326, %v1355
      %v1361 = vld [vmem:[%s8] sm:$0xff]
      %v1362 = vld [vmem:[%s8 + $0x8] sm:$0xff]
      %v1363 = vld [vmem:[%s8 + $0x10] sm:$0xff]
      %v1364 = vld [vmem:[%s8 + $0x18] sm:$0xff]
      %1366 = vset.pattern.permute.xlu0 0
      %1367 = vperm.xlu0 %1366, %v1361
      %v1368 = vpop.permute.xlu0 %1367
      %1371 = vset.pattern.permute.xlu0 0
      %1372 = vperm.xlu0 %1371, %v1362
      %v1373 = vpop.permute.xlu0 %1372
      %1376 = vset.pattern.permute.xlu0 0
      %1377 = vperm.xlu0 %1376, %v1363
      %v1378 = vpop.permute.xlu0 %1377
      %1381 = vset.pattern.permute.xlu0 0
      %1382 = vperm.xlu0 %1381, %v1364
      %v1383 = vpop.permute.xlu0 %1382
      %v1386 = vsel %vm387, %v1357, 0
      %v1389 = vsel %vm387, %v1358, 0
      %v1392 = vsel %vm387, %v1359, 0
      %v1395 = vsel %vm387, %v1360, 0
      %1397 = vmatprep.subr.mxu0 %v1316
      %1398 = vmatpush1.msra.mxu0 %v1315
      %1399 = vmatprep.subr.mxu0 %v1318
      %1400 = vmatpush1.msra.mxu0 %v1317
      %1401 = vmatprep.subr.mxu0 %v1320
      %1402 = vmatpush1.msra.mxu0 %v1319
      %1403 = vmatprep.subr.mxu0 %v1322
      %1404 = vmatpush1.msra.mxu0 %v1321
      %1405 = vmatprep.subr.mxu0 0.0
      %1406 = vmatpush1.msra.mxu0 0.0
      %1407 = vmatprep.subr.mxu0 0.0
      %1408 = vmatpush1.msra.mxu0 0.0
      %1409 = vmatprep.subr.mxu0 0.0
      %1410 = vmatpush1.msra.mxu0 0.0
      %1411 = vmatprep.subr.mxu0 0.0
      %1412 = vmatpush1.msra.mxu0 0.0
      %1413 = vmatprep.subr.mxu0 0.0
      %1414 = vmatpush1.msra.mxu0 0.0
      %1415 = vmatprep.subr.mxu0 0.0
      %1416 = vmatpush1.msra.mxu0 0.0
      %1417 = vmatprep.subr.mxu0 0.0
      %1418 = vmatpush1.msra.mxu0 0.0
      %1419 = vmatprep.subr.mxu0 0.0
      %1420 = vmatpush1.msra.mxu0 0.0
      %1421 = vmatprep.subr.mxu0 0.0
      %1422 = vmatpush1.msra.mxu0 0.0
      %1423 = vmatprep.subr.mxu0 0.0
      %1424 = vmatpush1.msra.mxu0 0.0
      %1425 = vmatprep.subr.mxu0 0.0
      %1426 = vmatpush1.msra.mxu0 0.0
      %1427 = vmatprep.subr.mxu0 0.0
      %1428 = vmatpush1.msra.mxu0 0.0
      %1429 = vmatprep.subr.mxu0 0.0
      %1430 = vmatpush1.msra.mxu0 0.0
      %1431 = vmatprep.subr.mxu0 0.0
      %1432 = vmatpush1.msra.mxu0 0.0
      %1433 = vmatprep.subr.mxu0 0.0
      %1434 = vmatpush1.msra.mxu0 0.0
      %1435 = vmatprep.subr.mxu0 0.0
      %1436 = vmatpush1.msra.mxu0 0.0
      %1437 = vmatprep.subr.mxu0 0.0
      %1438 = vmatpush1.msra.mxu0 0.0
      %1439 = vmatprep.subr.mxu0 0.0
      %1440 = vmatpush1.msra.mxu0 0.0
      %1441 = vmatprep.subr.mxu0 0.0
      %1442 = vmatpush1.msra.mxu0 0.0
      %1443 = vmatprep.subr.mxu0 0.0
      %1444 = vmatpush1.msra.mxu0 0.0
      %1445 = vmatprep.subr.mxu0 0.0
      %1446 = vmatpush1.msra.mxu0 0.0
      %1447 = vmatprep.subr.mxu0 0.0
      %1448 = vmatpush1.msra.mxu0 0.0
      %1449 = vmatprep.subr.mxu0 0.0
      %1450 = vmatpush1.msra.mxu0 0.0
      %1451 = vmatprep.subr.mxu0 0.0
      %1452 = vmatpush1.msra.mxu0 0.0
      %1453 = vmatprep.subr.mxu0 0.0
      %1454 = vmatpush1.msra.mxu0 0.0
      %1455 = vmatprep.subr.mxu0 0.0
      %1456 = vmatpush1.msra.mxu0 0.0
      %1457 = vmatprep.subr.mxu0 0.0
      %1458 = vmatpush1.msra.mxu0 0.0
      %1459 = vmatprep.subr.mxu0 0.0
      %1460 = vmatpush1.msra.mxu0 0.0
      %1461 = vmatprep.mubr.f32.mxu0 0.0
      %1462 = vmatmul.mubr.f32.gmra.mrb[0].mxu0 %v1386
      %v1463 = vpop.f32.mrb[0].mxu0
      %v1464 = vadd.f32 %v1368, %v1463
      %v1465 = vpop.f32.mrb[0].mxu0
      %v1466 = vadd.f32 %v1368, %v1465
      %1467 = vmatprep.mubr.f32.mxu0 0.0
      %1468 = vmatmul.mubr.f32.gmra.mrb[0].mxu0 %v1389
      %v1469 = vpop.f32.mrb[0].mxu0
      %v1470 = vadd.f32 %v1373, %v1469
      %v1471 = vpop.f32.mrb[0].mxu0
      %v1472 = vadd.f32 %v1373, %v1471
      %1473 = vmatprep.mubr.f32.mxu0 0.0
      %1474 = vmatmul.mubr.f32.gmra.mrb[0].mxu0 %v1392
      %v1475 = vpop.f32.mrb[0].mxu0
      %v1476 = vadd.f32 %v1378, %v1475
      %v1477 = vpop.f32.mrb[0].mxu0
      %v1478 = vadd.f32 %v1378, %v1477
      %1479 = vmatprep.mubr.f32.mxu0 0.0
      %1480 = vmatmul.mubr.f32.gmra.mrb[0].mxu0 %v1395
      %v1481 = vpop.f32.mrb[0].mxu0
      %v1482 = vadd.f32 %v1383, %v1481
      %v1483 = vpop.f32.mrb[0].mxu0
      %v1484 = vadd.f32 %v1383, %v1483
      %1485 = vdwg.mxu0
      %v1486 = vmax.f32 %v1464, 0.0
      %v1487 = vmax.f32 %v1466, 0.0
      %v1488 = vmax.f32 %v1470, 0.0
      %v1489 = vmax.f32 %v1472, 0.0
      %v1490 = vmax.f32 %v1476, 0.0
      %v1491 = vmax.f32 %v1478, 0.0
      %v1492 = vmax.f32 %v1482, 0.0
      %v1493 = vmax.f32 %v1484, 0.0
      %1502 = vrot.lane.b32.xlu0 %v1486, 32
      %v1503 = vpop.permute.xlu0 %1502
      %1504 = vrot.lane.b32.xlu0 %v1487, 32
      %v1505 = vpop.permute.xlu0 %1504
      %1506 = vrot.lane.b32.xlu0 %v1488, 32
      %v1507 = vpop.permute.xlu0 %1506
      %1508 = vrot.lane.b32.xlu0 %v1489, 32
      %v1509 = vpop.permute.xlu0 %1508
      %1510 = vrot.lane.b32.xlu0 %v1490, 32
      %v1511 = vpop.permute.xlu0 %1510
      %1512 = vrot.lane.b32.xlu0 %v1491, 32
      %v1513 = vpop.permute.xlu0 %1512
      %1514 = vrot.lane.b32.xlu0 %v1492, 32
      %v1515 = vpop.permute.xlu0 %1514
      %1516 = vrot.lane.b32.xlu0 %v1493, 32
      %v1517 = vpop.permute.xlu0 %1516
      %v1518 = vsel %vm387, %v1503, %v1505
      %v1519 = vsel %vm387, %v1507, %v1509
      %v1520 = vsel %vm387, %v1511, %v1513
      %v1521 = vsel %vm387, %v1515, %v1517
      %vm1534 = vcmask 1047808
      %1535 = vst.msk [vmem:[#allocation2] sm:$0xff] %vm1534, %v1503
      %1536 = vst [vmem:[#allocation2 + $0x8] sm:$0xff] %v1518
      %1537 = vst.msk [vmem:[#allocation2 + $0x10] sm:$0xff] %vm387, %v1505
      %1538 = vst.msk [vmem:[#allocation2 + $0x18] sm:$0xff] %vm1534, %v1507
      %1539 = vst [vmem:[#allocation2 + $0x20] sm:$0xff] %v1519
      %1540 = vst.msk [vmem:[#allocation2 + $0x28] sm:$0xff] %vm387, %v1509
      %1541 = vst.msk [vmem:[#allocation2 + $0x30] sm:$0xff] %vm1534, %v1511
      %1542 = vst [vmem:[#allocation2 + $0x38] sm:$0xff] %v1520
      %1543 = vst.msk [vmem:[#allocation2 + $0x40] sm:$0xff] %vm387, %v1513
      %1544 = vst.msk [vmem:[#allocation2 + $0x48] sm:$0xff] %vm1534, %v1515
      %1545 = vst [vmem:[#allocation2 + $0x50] sm:$0xff] %v1521
      %1546 = vst.msk [vmem:[#allocation2 + $0x58] sm:$0xff] %vm387, %v1517
      %v1547 = vld [vmem:[#allocation2] sm:$0xff]
      %v1548 = vld [vmem:[#allocation2 + $0x8] sm:$0xff]
      %v1549 = vld [vmem:[#allocation2 + $0x10] sm:$0xff]
      %v1550 = vld [vmem:[#allocation2 + $0x18] sm:$0xff]
      %v1551 = vld [vmem:[#allocation2 + $0x20] sm:$0xff]
      %v1552 = vld [vmem:[#allocation2 + $0x28] sm:$0xff]
      %v1553 = vld [vmem:[#allocation2 + $0x30] sm:$0xff]
      %v1554 = vld [vmem:[#allocation2 + $0x38] sm:$0xff]
      %v1555 = vld [vmem:[#allocation2 + $0x40] sm:$0xff]
      %v1556 = vld [vmem:[#allocation2 + $0x48] sm:$0xff]
      %v1557 = vld [vmem:[#allocation2 + $0x50] sm:$0xff]
      %v1558 = vld [vmem:[#allocation2 + $0x58] sm:$0xff]
      %v1560 = vlaneseq
      %v1561 = vshrl.u32 %v1560, 7
      %v1562 = vsub.s32 0, %v1561
      %v1563 = vrot.slane %v1248, %v1562
      %v1564 = vlaneseq
      %v1565 = vshrl.u32 %v1564, 7
      %v1566 = vsub.s32 1, %v1565
      %v1567 = vrot.slane %v1248, %v1566
      %1568 = vrot.lane.b32.xlu0 %v1563, 15
      %v1569 = vpop.permute.xlu0 %1568
      %1570 = vrot.lane.b32.xlu0 %v1567, 15
      %v1571 = vpop.permute.xlu0 %1570
      %vm1572 = vcmask 121856
      %v1573 = vsel %vm1572, %v1569, %v1571
      %v1577 = vmul.f32 %v1547, %v1569
      %v1578 = vmul.f32 %v1548, %v1573
      %v1579 = vmul.f32 %v1549, %v1571
      %v1580 = vmul.f32 %v1550, %v1569
      %v1581 = vmul.f32 %v1551, %v1573
      %v1582 = vmul.f32 %v1552, %v1571
      %v1583 = vmul.f32 %v1553, %v1569
      %v1584 = vmul.f32 %v1554, %v1573
      %v1585 = vmul.f32 %v1555, %v1571
      %v1586 = vmul.f32 %v1556, %v1569
      %v1587 = vmul.f32 %v1557, %v1573
      %v1588 = vmul.f32 %v1558, %v1571
      %v1590 = vlaneseq
      %v1591 = vshrl.u32 %v1590, 7
      %v1592 = vsub.s32 0, %v1591
      %v1593 = vrot.slane %v1250, %v1592
      %v1594 = vlaneseq
      %v1595 = vshrl.u32 %v1594, 7
      %v1596 = vsub.s32 1, %v1595
      %v1597 = vrot.slane %v1250, %v1596
      %1598 = vrot.lane.b32.xlu0 %v1593, 17
      %v1599 = vpop.permute.xlu0 %1598
      %1600 = vrot.lane.b32.xlu0 %v1597, 17
      %v1601 = vpop.permute.xlu0 %1600
      %vm1602 = vcmask 138240
      %v1603 = vsel %vm1602, %v1599, %v1601
      %v1607 = vmul.f32 %v1547, %v1599
      %v1608 = vmul.f32 %v1548, %v1603
      %v1609 = vmul.f32 %v1549, %v1601
      %v1610 = vmul.f32 %v1550, %v1599
      %v1611 = vmul.f32 %v1551, %v1603
      %v1612 = vmul.f32 %v1552, %v1601
      %v1613 = vmul.f32 %v1553, %v1599
      %v1614 = vmul.f32 %v1554, %v1603
      %v1615 = vmul.f32 %v1555, %v1601
      %v1616 = vmul.f32 %v1556, %v1599
      %v1617 = vmul.f32 %v1557, %v1603
      %v1618 = vmul.f32 %v1558, %v1601
      %1619 = vrot.lane.b32.xlu0 %v1563, 31
      %v1620 = vpop.permute.xlu0 %1619
      %1621 = vrot.lane.b32.xlu0 %v1567, 31
      %v1622 = vpop.permute.xlu0 %1621
      %vm1623 = vcmask 252928
      %v1624 = vsel %vm1623, %v1620, %v1622
      %v1628 = vmul.f32 %v1547, %v1620
      %v1629 = vmul.f32 %v1548, %v1624
      %v1630 = vmul.f32 %v1549, %v1622
      %v1631 = vmul.f32 %v1550, %v1620
      %v1632 = vmul.f32 %v1551, %v1624
      %v1633 = vmul.f32 %v1552, %v1622
      %v1634 = vmul.f32 %v1553, %v1620
      %v1635 = vmul.f32 %v1554, %v1624
      %v1636 = vmul.f32 %v1555, %v1622
      %v1637 = vmul.f32 %v1556, %v1620
      %v1638 = vmul.f32 %v1557, %v1624
      %v1639 = vmul.f32 %v1558, %v1622
      %1640 = vrot.lane.b32.xlu0 %v1593, 33
      %v1641 = vpop.permute.xlu0 %1640
      %1642 = vrot.lane.b32.xlu0 %v1597, 33
      %v1643 = vpop.permute.xlu0 %1642
      %vm1644 = vcmask 269312
      %v1645 = vsel %vm1644, %v1641, %v1643
      %v1649 = vmul.f32 %v1547, %v1641
      %v1650 = vmul.f32 %v1548, %v1645
      %v1651 = vmul.f32 %v1549, %v1643
      %v1652 = vmul.f32 %v1550, %v1641
      %v1653 = vmul.f32 %v1551, %v1645
      %v1654 = vmul.f32 %v1552, %v1643
      %v1655 = vmul.f32 %v1553, %v1641
      %v1656 = vmul.f32 %v1554, %v1645
      %v1657 = vmul.f32 %v1555, %v1643
      %v1658 = vmul.f32 %v1556, %v1641
      %v1659 = vmul.f32 %v1557, %v1645
      %v1660 = vmul.f32 %v1558, %v1643
      %1661 = vrot.lane.b32.xlu0 %v1563, 47
      %v1662 = vpop.permute.xlu0 %1661
      %1663 = vrot.lane.b32.xlu0 %v1567, 47
      %v1664 = vpop.permute.xlu0 %1663
      %vm1665 = vcmask 384000
      %v1666 = vsel %vm1665, %v1662, %v1664
      %v1670 = vmul.f32 %v1547, %v1662
      %v1671 = vmul.f32 %v1548, %v1666
      %v1672 = vmul.f32 %v1549, %v1664
      %v1673 = vmul.f32 %v1550, %v1662
      %v1674 = vmul.f32 %v1551, %v1666
      %v1675 = vmul.f32 %v1552, %v1664
      %v1676 = vmul.f32 %v1553, %v1662
      %v1677 = vmul.f32 %v1554, %v1666
      %v1678 = vmul.f32 %v1555, %v1664
      %v1679 = vmul.f32 %v1556, %v1662
      %v1680 = vmul.f32 %v1557, %v1666
      %v1681 = vmul.f32 %v1558, %v1664
      %1682 = vrot.lane.b32.xlu0 %v1593, 49
      %v1683 = vpop.permute.xlu0 %1682
      %1684 = vrot.lane.b32.xlu0 %v1597, 49
      %v1685 = vpop.permute.xlu0 %1684
      %vm1686 = vcmask 400384
      %v1687 = vsel %vm1686, %v1683, %v1685
      %v1691 = vmul.f32 %v1547, %v1683
      %v1692 = vmul.f32 %v1548, %v1687
      %v1693 = vmul.f32 %v1549, %v1685
      %v1694 = vmul.f32 %v1550, %v1683
      %v1695 = vmul.f32 %v1551, %v1687
      %v1696 = vmul.f32 %v1552, %v1685
      %v1697 = vmul.f32 %v1553, %v1683
      %v1698 = vmul.f32 %v1554, %v1687
      %v1699 = vmul.f32 %v1555, %v1685
      %v1700 = vmul.f32 %v1556, %v1683
      %v1701 = vmul.f32 %v1557, %v1687
      %v1702 = vmul.f32 %v1558, %v1685
      %1715 = vrot.lane.b32.xlu0 %v1547, 127
      %v1716 = vpop.permute.xlu0 %1715
      %1717 = vrot.lane.b32.xlu0 %v1548, 127
      %v1718 = vpop.permute.xlu0 %1717
      %1719 = vrot.lane.b32.xlu0 %v1549, 127
      %v1720 = vpop.permute.xlu0 %1719
      %1721 = vrot.lane.b32.xlu0 %v1550, 127
      %v1722 = vpop.permute.xlu0 %1721
      %1723 = vrot.lane.b32.xlu0 %v1551, 127
      %v1724 = vpop.permute.xlu0 %1723
      %1725 = vrot.lane.b32.xlu0 %v1552, 127
      %v1726 = vpop.permute.xlu0 %1725
      %1727 = vrot.lane.b32.xlu0 %v1553, 127
      %v1728 = vpop.permute.xlu0 %1727
      %1729 = vrot.lane.b32.xlu0 %v1554, 127
      %v1730 = vpop.permute.xlu0 %1729
      %1731 = vrot.lane.b32.xlu0 %v1555, 127
      %v1732 = vpop.permute.xlu0 %1731
      %1733 = vrot.lane.b32.xlu0 %v1556, 127
      %v1734 = vpop.permute.xlu0 %1733
      %1735 = vrot.lane.b32.xlu0 %v1557, 127
      %v1736 = vpop.permute.xlu0 %1735
      %1737 = vrot.lane.b32.xlu0 %v1558, 127
      %v1738 = vpop.permute.xlu0 %1737
      %vm1739 = vcmask 1039360
      %v1740 = vsel %vm1739, %v1716, %v1718
      %v1741 = vsel %vm1739, %v1718, %v1720
      %v1742 = vsel %vm1739, %v1722, %v1724
      %v1743 = vsel %vm1739, %v1724, %v1726
      %v1744 = vsel %vm1739, %v1728, %v1730
      %v1745 = vsel %vm1739, %v1730, %v1732
      %v1746 = vsel %vm1739, %v1734, %v1736
      %v1747 = vsel %vm1739, %v1736, %v1738
      %1760 = vrot.lane.b32.xlu0 %v1607, 126
      %v1761 = vpop.permute.xlu0 %1760
      %1762 = vrot.lane.b32.xlu0 %v1608, 126
      %v1763 = vpop.permute.xlu0 %1762
      %1764 = vrot.lane.b32.xlu0 %v1609, 126
      %v1765 = vpop.permute.xlu0 %1764
      %1766 = vrot.lane.b32.xlu0 %v1610, 126
      %v1767 = vpop.permute.xlu0 %1766
      %1768 = vrot.lane.b32.xlu0 %v1611, 126
      %v1769 = vpop.permute.xlu0 %1768
      %1770 = vrot.lane.b32.xlu0 %v1612, 126
      %v1771 = vpop.permute.xlu0 %1770
      %1772 = vrot.lane.b32.xlu0 %v1613, 126
      %v1773 = vpop.permute.xlu0 %1772
      %1774 = vrot.lane.b32.xlu0 %v1614, 126
      %v1775 = vpop.permute.xlu0 %1774
      %1776 = vrot.lane.b32.xlu0 %v1615, 126
      %v1777 = vpop.permute.xlu0 %1776
      %1778 = vrot.lane.b32.xlu0 %v1616, 126
      %v1779 = vpop.permute.xlu0 %1778
      %1780 = vrot.lane.b32.xlu0 %v1617, 126
      %v1781 = vpop.permute.xlu0 %1780
      %1782 = vrot.lane.b32.xlu0 %v1618, 126
      %v1783 = vpop.permute.xlu0 %1782
      %vm1784 = vcmask 1031168
      %v1785 = vsel %vm1784, %v1761, %v1763
      %v1786 = vsel %vm1784, %v1763, %v1765
      %v1787 = vsel %vm1784, %v1767, %v1769
      %v1788 = vsel %vm1784, %v1769, %v1771
      %v1789 = vsel %vm1784, %v1773, %v1775
      %v1790 = vsel %vm1784, %v1775, %v1777
      %v1791 = vsel %vm1784, %v1779, %v1781
      %v1792 = vsel %vm1784, %v1781, %v1783
      %1805 = vrot.lane.b32.xlu0 %v1628, 112
      %v1806 = vpop.permute.xlu0 %1805
      %1807 = vrot.lane.b32.xlu0 %v1629, 112
      %v1808 = vpop.permute.xlu0 %1807
      %1809 = vrot.lane.b32.xlu0 %v1630, 112
      %v1810 = vpop.permute.xlu0 %1809
      %1811 = vrot.lane.b32.xlu0 %v1631, 112
      %v1812 = vpop.permute.xlu0 %1811
      %1813 = vrot.lane.b32.xlu0 %v1632, 112
      %v1814 = vpop.permute.xlu0 %1813
      %1815 = vrot.lane.b32.xlu0 %v1633, 112
      %v1816 = vpop.permute.xlu0 %1815
      %1817 = vrot.lane.b32.xlu0 %v1634, 112
      %v1818 = vpop.permute.xlu0 %1817
      %1819 = vrot.lane.b32.xlu0 %v1635, 112
      %v1820 = vpop.permute.xlu0 %1819
      %1821 = vrot.lane.b32.xlu0 %v1636, 112
      %v1822 = vpop.permute.xlu0 %1821
      %1823 = vrot.lane.b32.xlu0 %v1637, 112
      %v1824 = vpop.permute.xlu0 %1823
      %1825 = vrot.lane.b32.xlu0 %v1638, 112
      %v1826 = vpop.permute.xlu0 %1825
      %1827 = vrot.lane.b32.xlu0 %v1639, 112
      %v1828 = vpop.permute.xlu0 %1827
      %vm1829 = vcmask 916480
      %v1830 = vsel %vm1829, %v1806, %v1808
      %v1831 = vsel %vm1829, %v1808, %v1810
      %v1832 = vsel %vm1829, %v1812, %v1814
      %v1833 = vsel %vm1829, %v1814, %v1816
      %v1834 = vsel %vm1829, %v1818, %v1820
      %v1835 = vsel %vm1829, %v1820, %v1822
      %v1836 = vsel %vm1829, %v1824, %v1826
      %v1837 = vsel %vm1829, %v1826, %v1828
      %1838 = vrot.lane.b32.xlu0 %v1547, 111
      %v1839 = vpop.permute.xlu0 %1838
      %1840 = vrot.lane.b32.xlu0 %v1548, 111
      %v1841 = vpop.permute.xlu0 %1840
      %1842 = vrot.lane.b32.xlu0 %v1549, 111
      %v1843 = vpop.permute.xlu0 %1842
      %1844 = vrot.lane.b32.xlu0 %v1550, 111
      %v1845 = vpop.permute.xlu0 %1844
      %1846 = vrot.lane.b32.xlu0 %v1551, 111
      %v1847 = vpop.permute.xlu0 %1846
      %1848 = vrot.lane.b32.xlu0 %v1552, 111
      %v1849 = vpop.permute.xlu0 %1848
      %1850 = vrot.lane.b32.xlu0 %v1553, 111
      %v1851 = vpop.permute.xlu0 %1850
      %1852 = vrot.lane.b32.xlu0 %v1554, 111
      %v1853 = vpop.permute.xlu0 %1852
      %1854 = vrot.lane.b32.xlu0 %v1555, 111
      %v1855 = vpop.permute.xlu0 %1854
      %1856 = vrot.lane.b32.xlu0 %v1556, 111
      %v1857 = vpop.permute.xlu0 %1856
      %1858 = vrot.lane.b32.xlu0 %v1557, 111
      %v1859 = vpop.permute.xlu0 %1858
      %1860 = vrot.lane.b32.xlu0 %v1558, 111
      %v1861 = vpop.permute.xlu0 %1860
      %vm1862 = vcmask 908288
      %v1863 = vsel %vm1862, %v1839, %v1841
      %v1864 = vsel %vm1862, %v1841, %v1843
      %v1865 = vsel %vm1862, %v1845, %v1847
      %v1866 = vsel %vm1862, %v1847, %v1849
      %v1867 = vsel %vm1862, %v1851, %v1853
      %v1868 = vsel %vm1862, %v1853, %v1855
      %v1869 = vsel %vm1862, %v1857, %v1859
      %v1870 = vsel %vm1862, %v1859, %v1861
      %1883 = vrot.lane.b32.xlu0 %v1649, 110
      %v1884 = vpop.permute.xlu0 %1883
      %1885 = vrot.lane.b32.xlu0 %v1650, 110
      %v1886 = vpop.permute.xlu0 %1885
      %1887 = vrot.lane.b32.xlu0 %v1651, 110
      %v1888 = vpop.permute.xlu0 %1887
      %1889 = vrot.lane.b32.xlu0 %v1652, 110
      %v1890 = vpop.permute.xlu0 %1889
      %1891 = vrot.lane.b32.xlu0 %v1653, 110
      %v1892 = vpop.permute.xlu0 %1891
      %1893 = vrot.lane.b32.xlu0 %v1654, 110
      %v1894 = vpop.permute.xlu0 %1893
      %1895 = vrot.lane.b32.xlu0 %v1655, 110
      %v1896 = vpop.permute.xlu0 %1895
      %1897 = vrot.lane.b32.xlu0 %v1656, 110
      %v1898 = vpop.permute.xlu0 %1897
      %1899 = vrot.lane.b32.xlu0 %v1657, 110
      %v1900 = vpop.permute.xlu0 %1899
      %1901 = vrot.lane.b32.xlu0 %v1658, 110
      %v1902 = vpop.permute.xlu0 %1901
      %1903 = vrot.lane.b32.xlu0 %v1659, 110
      %v1904 = vpop.permute.xlu0 %1903
      %1905 = vrot.lane.b32.xlu0 %v1660, 110
      %v1906 = vpop.permute.xlu0 %1905
      %vm1907 = vcmask 900096
      %v1908 = vsel %vm1907, %v1884, %v1886
      %v1909 = vsel %vm1907, %v1886, %v1888
      %v1910 = vsel %vm1907, %v1890, %v1892
      %v1911 = vsel %vm1907, %v1892, %v1894
      %v1912 = vsel %vm1907, %v1896, %v1898
      %v1913 = vsel %vm1907, %v1898, %v1900
      %v1914 = vsel %vm1907, %v1902, %v1904
      %v1915 = vsel %vm1907, %v1904, %v1906
      %1928 = vrot.lane.b32.xlu0 %v1670, 96
      %v1929 = vpop.permute.xlu0 %1928
      %1930 = vrot.lane.b32.xlu0 %v1671, 96
      %v1931 = vpop.permute.xlu0 %1930
      %1932 = vrot.lane.b32.xlu0 %v1672, 96
      %v1933 = vpop.permute.xlu0 %1932
      %1934 = vrot.lane.b32.xlu0 %v1673, 96
      %v1935 = vpop.permute.xlu0 %1934
      %1936 = vrot.lane.b32.xlu0 %v1674, 96
      %v1937 = vpop.permute.xlu0 %1936
      %1938 = vrot.lane.b32.xlu0 %v1675, 96
      %v1939 = vpop.permute.xlu0 %1938
      %1940 = vrot.lane.b32.xlu0 %v1676, 96
      %v1941 = vpop.permute.xlu0 %1940
      %1942 = vrot.lane.b32.xlu0 %v1677, 96
      %v1943 = vpop.permute.xlu0 %1942
      %1944 = vrot.lane.b32.xlu0 %v1678, 96
      %v1945 = vpop.permute.xlu0 %1944
      %1946 = vrot.lane.b32.xlu0 %v1679, 96
      %v1947 = vpop.permute.xlu0 %1946
      %1948 = vrot.lane.b32.xlu0 %v1680, 96
      %v1949 = vpop.permute.xlu0 %1948
      %1950 = vrot.lane.b32.xlu0 %v1681, 96
      %v1951 = vpop.permute.xlu0 %1950
      %vm1952 = vcmask 785408
      %v1953 = vsel %vm1952, %v1929, %v1931
      %v1954 = vsel %vm1952, %v1931, %v1933
      %v1955 = vsel %vm1952, %v1935, %v1937
      %v1956 = vsel %vm1952, %v1937, %v1939
      %v1957 = vsel %vm1952, %v1941, %v1943
      %v1958 = vsel %vm1952, %v1943, %v1945
      %v1959 = vsel %vm1952, %v1947, %v1949
      %v1960 = vsel %vm1952, %v1949, %v1951
      %1961 = vrot.lane.b32.xlu0 %v1547, 95
      %v1962 = vpop.permute.xlu0 %1961
      %1963 = vrot.lane.b32.xlu0 %v1548, 95
      %v1964 = vpop.permute.xlu0 %1963
      %1965 = vrot.lane.b32.xlu0 %v1549, 95
      %v1966 = vpop.permute.xlu0 %1965
      %1967 = vrot.lane.b32.xlu0 %v1550, 95
      %v1968 = vpop.permute.xlu0 %1967
      %1969 = vrot.lane.b32.xlu0 %v1551, 95
      %v1970 = vpop.permute.xlu0 %1969
      %1971 = vrot.lane.b32.xlu0 %v1552, 95
      %v1972 = vpop.permute.xlu0 %1971
      %1973 = vrot.lane.b32.xlu0 %v1553, 95
      %v1974 = vpop.permute.xlu0 %1973
      %1975 = vrot.lane.b32.xlu0 %v1554, 95
      %v1976 = vpop.permute.xlu0 %1975
      %1977 = vrot.lane.b32.xlu0 %v1555, 95
      %v1978 = vpop.permute.xlu0 %1977
      %1979 = vrot.lane.b32.xlu0 %v1556, 95
      %v1980 = vpop.permute.xlu0 %1979
      %1981 = vrot.lane.b32.xlu0 %v1557, 95
      %v1982 = vpop.permute.xlu0 %1981
      %1983 = vrot.lane.b32.xlu0 %v1558, 95
      %v1984 = vpop.permute.xlu0 %1983
      %vm1985 = vcmask 777216
      %v1986 = vsel %vm1985, %v1962, %v1964
      %v1987 = vsel %vm1985, %v1964, %v1966
      %v1988 = vsel %vm1985, %v1968, %v1970
      %v1989 = vsel %vm1985, %v1970, %v1972
      %v1990 = vsel %vm1985, %v1974, %v1976
      %v1991 = vsel %vm1985, %v1976, %v1978
      %v1992 = vsel %vm1985, %v1980, %v1982
      %v1993 = vsel %vm1985, %v1982, %v1984
      %2006 = vrot.lane.b32.xlu0 %v1691, 94
      %v2007 = vpop.permute.xlu0 %2006
      %2008 = vrot.lane.b32.xlu0 %v1692, 94
      %v2009 = vpop.permute.xlu0 %2008
      %2010 = vrot.lane.b32.xlu0 %v1693, 94
      %v2011 = vpop.permute.xlu0 %2010
      %2012 = vrot.lane.b32.xlu0 %v1694, 94
      %v2013 = vpop.permute.xlu0 %2012
      %2014 = vrot.lane.b32.xlu0 %v1695, 94
      %v2015 = vpop.permute.xlu0 %2014
      %2016 = vrot.lane.b32.xlu0 %v1696, 94
      %v2017 = vpop.permute.xlu0 %2016
      %2018 = vrot.lane.b32.xlu0 %v1697, 94
      %v2019 = vpop.permute.xlu0 %2018
      %2020 = vrot.lane.b32.xlu0 %v1698, 94
      %v2021 = vpop.permute.xlu0 %2020
      %2022 = vrot.lane.b32.xlu0 %v1699, 94
      %v2023 = vpop.permute.xlu0 %2022
      %2024 = vrot.lane.b32.xlu0 %v1700, 94
      %v2025 = vpop.permute.xlu0 %2024
      %2026 = vrot.lane.b32.xlu0 %v1701, 94
      %v2027 = vpop.permute.xlu0 %2026
      %2028 = vrot.lane.b32.xlu0 %v1702, 94
      %v2029 = vpop.permute.xlu0 %2028
      %vm2030 = vcmask 769024
      %v2031 = vsel %vm2030, %v2007, %v2009
      %v2032 = vsel %vm2030, %v2009, %v2011
      %v2033 = vsel %vm2030, %v2013, %v2015
      %v2034 = vsel %vm2030, %v2015, %v2017
      %v2035 = vsel %vm2030, %v2019, %v2021
      %v2036 = vsel %vm2030, %v2021, %v2023
      %v2037 = vsel %vm2030, %v2025, %v2027
      %v2038 = vsel %vm2030, %v2027, %v2029
      %v2039 = vld [vmem:[%s9] sm:$0xff]
      %v2040 = vld [vmem:[%s9 + $0x8] sm:$0xff]
      %v2041 = vld [vmem:[%s9 + $0x10] sm:$0xff]
      %2054 = vrot.lane.b32.xlu0 %v1577, 113
      %v2055 = vpop.permute.xlu0 %2054
      %2056 = vrot.lane.b32.xlu0 %v1578, 113
      %v2057 = vpop.permute.xlu0 %2056
      %2058 = vrot.lane.b32.xlu0 %v1579, 113
      %v2059 = vpop.permute.xlu0 %2058
      %2060 = vrot.lane.b32.xlu0 %v1580, 113
      %v2061 = vpop.permute.xlu0 %2060
      %2062 = vrot.lane.b32.xlu0 %v1581, 113
      %v2063 = vpop.permute.xlu0 %2062
      %2064 = vrot.lane.b32.xlu0 %v1582, 113
      %v2065 = vpop.permute.xlu0 %2064
      %2066 = vrot.lane.b32.xlu0 %v1583, 113
      %v2067 = vpop.permute.xlu0 %2066
      %2068 = vrot.lane.b32.xlu0 %v1584, 113
      %v2069 = vpop.permute.xlu0 %2068
      %2070 = vrot.lane.b32.xlu0 %v1585, 113
      %v2071 = vpop.permute.xlu0 %2070
      %2072 = vrot.lane.b32.xlu0 %v1586, 113
      %v2073 = vpop.permute.xlu0 %2072
      %2074 = vrot.lane.b32.xlu0 %v1587, 113
      %v2075 = vpop.permute.xlu0 %2074
      %2076 = vrot.lane.b32.xlu0 %v1588, 113
      %v2077 = vpop.permute.xlu0 %2076
      %2078 = vrot.lane.b32.xlu0 %v1740, 113
      %v2079 = vpop.permute.xlu0 %2078
      %2080 = vrot.lane.b32.xlu0 %v1741, 113
      %v2081 = vpop.permute.xlu0 %2080
      %2082 = vrot.lane.b32.xlu0 %v1720, 113
      %v2083 = vpop.permute.xlu0 %2082
      %2084 = vrot.lane.b32.xlu0 %v1742, 113
      %v2085 = vpop.permute.xlu0 %2084
      %2086 = vrot.lane.b32.xlu0 %v1743, 113
      %v2087 = vpop.permute.xlu0 %2086
      %2088 = vrot.lane.b32.xlu0 %v1726, 113
      %v2089 = vpop.permute.xlu0 %2088
      %2090 = vrot.lane.b32.xlu0 %v1744, 113
      %v2091 = vpop.permute.xlu0 %2090
      %2092 = vrot.lane.b32.xlu0 %v1745, 113
      %v2093 = vpop.permute.xlu0 %2092
      %2094 = vrot.lane.b32.xlu0 %v1732, 113
      %v2095 = vpop.permute.xlu0 %2094
      %2096 = vrot.lane.b32.xlu0 %v1746, 113
      %v2097 = vpop.permute.xlu0 %2096
      %2098 = vrot.lane.b32.xlu0 %v1747, 113
      %v2099 = vpop.permute.xlu0 %2098
      %2100 = vrot.lane.b32.xlu0 %v1738, 113
      %v2101 = vpop.permute.xlu0 %2100
      %2102 = vrot.lane.b32.xlu0 %v1785, 113
      %v2103 = vpop.permute.xlu0 %2102
      %2104 = vrot.lane.b32.xlu0 %v1786, 113
      %v2105 = vpop.permute.xlu0 %2104
      %2106 = vrot.lane.b32.xlu0 %v1765, 113
      %v2107 = vpop.permute.xlu0 %2106
      %2108 = vrot.lane.b32.xlu0 %v1787, 113
      %v2109 = vpop.permute.xlu0 %2108
      %2110 = vrot.lane.b32.xlu0 %v1788, 113
      %v2111 = vpop.permute.xlu0 %2110
      %2112 = vrot.lane.b32.xlu0 %v1771, 113
      %v2113 = vpop.permute.xlu0 %2112
      %2114 = vrot.lane.b32.xlu0 %v1789, 113
      %v2115 = vpop.permute.xlu0 %2114
      %2116 = vrot.lane.b32.xlu0 %v1790, 113
      %v2117 = vpop.permute.xlu0 %2116
      %2118 = vrot.lane.b32.xlu0 %v1777, 113
      %v2119 = vpop.permute.xlu0 %2118
      %2120 = vrot.lane.b32.xlu0 %v1791, 113
      %v2121 = vpop.permute.xlu0 %2120
      %2122 = vrot.lane.b32.xlu0 %v1792, 113
      %v2123 = vpop.permute.xlu0 %2122
      %2124 = vrot.lane.b32.xlu0 %v1783, 113
      %v2125 = vpop.permute.xlu0 %2124
      %2126 = vrot.lane.b32.xlu0 %v1830, 113
      %v2127 = vpop.permute.xlu0 %2126
      %2128 = vrot.lane.b32.xlu0 %v1831, 113
      %v2129 = vpop.permute.xlu0 %2128
      %2130 = vrot.lane.b32.xlu0 %v1810, 113
      %v2131 = vpop.permute.xlu0 %2130
      %2132 = vrot.lane.b32.xlu0 %v1832, 113
      %v2133 = vpop.permute.xlu0 %2132
      %2134 = vrot.lane.b32.xlu0 %v1833, 113
      %v2135 = vpop.permute.xlu0 %2134
      %2136 = vrot.lane.b32.xlu0 %v1816, 113
      %v2137 = vpop.permute.xlu0 %2136
      %2138 = vrot.lane.b32.xlu0 %v1834, 113
      %v2139 = vpop.permute.xlu0 %2138
      %2140 = vrot.lane.b32.xlu0 %v1835, 113
      %v2141 = vpop.permute.xlu0 %2140
      %2142 = vrot.lane.b32.xlu0 %v1822, 113
      %v2143 = vpop.permute.xlu0 %2142
      %2144 = vrot.lane.b32.xlu0 %v1836, 113
      %v2145 = vpop.permute.xlu0 %2144
      %2146 = vrot.lane.b32.xlu0 %v1837, 113
      %v2147 = vpop.permute.xlu0 %2146
      %2148 = vrot.lane.b32.xlu0 %v1828, 113
      %v2149 = vpop.permute.xlu0 %2148
      %2150 = vrot.lane.b32.xlu0 %v1863, 113
      %v2151 = vpop.permute.xlu0 %2150
      %2152 = vrot.lane.b32.xlu0 %v1864, 113
      %v2153 = vpop.permute.xlu0 %2152
      %2154 = vrot.lane.b32.xlu0 %v1843, 113
      %v2155 = vpop.permute.xlu0 %2154
      %2156 = vrot.lane.b32.xlu0 %v1865, 113
      %v2157 = vpop.permute.xlu0 %2156
      %2158 = vrot.lane.b32.xlu0 %v1866, 113
      %v2159 = vpop.permute.xlu0 %2158
      %2160 = vrot.lane.b32.xlu0 %v1849, 113
      %v2161 = vpop.permute.xlu0 %2160
      %2162 = vrot.lane.b32.xlu0 %v1867, 113
      %v2163 = vpop.permute.xlu0 %2162
      %2164 = vrot.lane.b32.xlu0 %v1868, 113
      %v2165 = vpop.permute.xlu0 %2164
      %2166 = vrot.lane.b32.xlu0 %v1855, 113
      %v2167 = vpop.permute.xlu0 %2166
      %2168 = vrot.lane.b32.xlu0 %v1869, 113
      %v2169 = vpop.permute.xlu0 %2168
      %2170 = vrot.lane.b32.xlu0 %v1870, 113
      %v2171 = vpop.permute.xlu0 %2170
      %2172 = vrot.lane.b32.xlu0 %v1861, 113
      %v2173 = vpop.permute.xlu0 %2172
      %2174 = vrot.lane.b32.xlu0 %v1908, 113
      %v2175 = vpop.permute.xlu0 %2174
      %2176 = vrot.lane.b32.xlu0 %v1909, 113
      %v2177 = vpop.permute.xlu0 %2176
      %2178 = vrot.lane.b32.xlu0 %v1888, 113
      %v2179 = vpop.permute.xlu0 %2178
      %2180 = vrot.lane.b32.xlu0 %v1910, 113
      %v2181 = vpop.permute.xlu0 %2180
      %2182 = vrot.lane.b32.xlu0 %v1911, 113
      %v2183 = vpop.permute.xlu0 %2182
      %2184 = vrot.lane.b32.xlu0 %v1894, 113
      %v2185 = vpop.permute.xlu0 %2184
      %2186 = vrot.lane.b32.xlu0 %v1912, 113
      %v2187 = vpop.permute.xlu0 %2186
      %2188 = vrot.lane.b32.xlu0 %v1913, 113
      %v2189 = vpop.permute.xlu0 %2188
      %2190 = vrot.lane.b32.xlu0 %v1900, 113
      %v2191 = vpop.permute.xlu0 %2190
      %2192 = vrot.lane.b32.xlu0 %v1914, 113
      %v2193 = vpop.permute.xlu0 %2192
      %2194 = vrot.lane.b32.xlu0 %v1915, 113
      %v2195 = vpop.permute.xlu0 %2194
      %2196 = vrot.lane.b32.xlu0 %v1906, 113
      %v2197 = vpop.permute.xlu0 %2196
      %2198 = vrot.lane.b32.xlu0 %v1953, 113
      %v2199 = vpop.permute.xlu0 %2198
      %2200 = vrot.lane.b32.xlu0 %v1954, 113
      %v2201 = vpop.permute.xlu0 %2200
      %2202 = vrot.lane.b32.xlu0 %v1933, 113
      %v2203 = vpop.permute.xlu0 %2202
      %2204 = vrot.lane.b32.xlu0 %v1955, 113
      %v2205 = vpop.permute.xlu0 %2204
      %2206 = vrot.lane.b32.xlu0 %v1956, 113
      %v2207 = vpop.permute.xlu0 %2206
      %2208 = vrot.lane.b32.xlu0 %v1939, 113
      %v2209 = vpop.permute.xlu0 %2208
      %2210 = vrot.lane.b32.xlu0 %v1957, 113
      %v2211 = vpop.permute.xlu0 %2210
      %2212 = vrot.lane.b32.xlu0 %v1958, 113
      %v2213 = vpop.permute.xlu0 %2212
      %2214 = vrot.lane.b32.xlu0 %v1945, 113
      %v2215 = vpop.permute.xlu0 %2214
      %2216 = vrot.lane.b32.xlu0 %v1959, 113
      %v2217 = vpop.permute.xlu0 %2216
      %2218 = vrot.lane.b32.xlu0 %v1960, 113
      %v2219 = vpop.permute.xlu0 %2218
      %2220 = vrot.lane.b32.xlu0 %v1951, 113
      %v2221 = vpop.permute.xlu0 %2220
      %2222 = vrot.lane.b32.xlu0 %v1986, 113
      %v2223 = vpop.permute.xlu0 %2222
      %2224 = vrot.lane.b32.xlu0 %v1987, 113
      %v2225 = vpop.permute.xlu0 %2224
      %2226 = vrot.lane.b32.xlu0 %v1966, 113
      %v2227 = vpop.permute.xlu0 %2226
      %2228 = vrot.lane.b32.xlu0 %v1988, 113
      %v2229 = vpop.permute.xlu0 %2228
      %2230 = vrot.lane.b32.xlu0 %v1989, 113
      %v2231 = vpop.permute.xlu0 %2230
      %2232 = vrot.lane.b32.xlu0 %v1972, 113
      %v2233 = vpop.permute.xlu0 %2232
      %2234 = vrot.lane.b32.xlu0 %v1990, 113
      %v2235 = vpop.permute.xlu0 %2234
      %2236 = vrot.lane.b32.xlu0 %v1991, 113
      %v2237 = vpop.permute.xlu0 %2236
      %2238 = vrot.lane.b32.xlu0 %v1978, 113
      %v2239 = vpop.permute.xlu0 %2238
      %2240 = vrot.lane.b32.xlu0 %v1992, 113
      %v2241 = vpop.permute.xlu0 %2240
      %2242 = vrot.lane.b32.xlu0 %v1993, 113
      %v2243 = vpop.permute.xlu0 %2242
      %2244 = vrot.lane.b32.xlu0 %v1984, 113
      %v2245 = vpop.permute.xlu0 %2244
      %2246 = vrot.lane.b32.xlu0 %v2031, 113
      %v2247 = vpop.permute.xlu0 %2246
      %2248 = vrot.lane.b32.xlu0 %v2032, 113
      %v2249 = vpop.permute.xlu0 %2248
      %2250 = vrot.lane.b32.xlu0 %v2011, 113
      %v2251 = vpop.permute.xlu0 %2250
      %2252 = vrot.lane.b32.xlu0 %v2033, 113
      %v2253 = vpop.permute.xlu0 %2252
      %2254 = vrot.lane.b32.xlu0 %v2034, 113
      %v2255 = vpop.permute.xlu0 %2254
      %2256 = vrot.lane.b32.xlu0 %v2017, 113
      %v2257 = vpop.permute.xlu0 %2256
      %2258 = vrot.lane.b32.xlu0 %v2035, 113
      %v2259 = vpop.permute.xlu0 %2258
      %2260 = vrot.lane.b32.xlu0 %v2036, 113
      %v2261 = vpop.permute.xlu0 %2260
      %2262 = vrot.lane.b32.xlu0 %v2023, 113
      %v2263 = vpop.permute.xlu0 %2262
      %2264 = vrot.lane.b32.xlu0 %v2037, 113
      %v2265 = vpop.permute.xlu0 %2264
      %2266 = vrot.lane.b32.xlu0 %v2038, 113
      %v2267 = vpop.permute.xlu0 %2266
      %2268 = vrot.lane.b32.xlu0 %v2029, 113
      %v2269 = vpop.permute.xlu0 %2268
      %vm2270 = vcmask 924672
      %v2271 = vsel %vm2270, %v2055, %v2057
      %v2272 = vsel %vm2270, %v2057, %v2059
      %v2273 = vsel %vm2270, %v2061, %v2063
      %v2274 = vsel %vm2270, %v2063, %v2065
      %v2275 = vsel %vm2270, %v2067, %v2069
      %v2276 = vsel %vm2270, %v2069, %v2071
      %v2277 = vsel %vm2270, %v2073, %v2075
      %v2278 = vsel %vm2270, %v2075, %v2077
      %v2279 = vsel %vm2270, %v2079, %v2081
      %v2280 = vsel %vm2270, %v2081, %v2083
      %v2281 = vsel %vm2270, %v2085, %v2087
      %v2282 = vsel %vm2270, %v2087, %v2089
      %v2283 = vsel %vm2270, %v2091, %v2093
      %v2284 = vsel %vm2270, %v2093, %v2095
      %v2285 = vsel %vm2270, %v2097, %v2099
      %v2286 = vsel %vm2270, %v2099, %v2101
      %v2287 = vsel %vm2270, %v2103, %v2105
      %v2288 = vsel %vm2270, %v2105, %v2107
      %v2289 = vsel %vm2270, %v2109, %v2111
      %v2290 = vsel %vm2270, %v2111, %v2113
      %v2291 = vsel %vm2270, %v2115, %v2117
      %v2292 = vsel %vm2270, %v2117, %v2119
      %v2293 = vsel %vm2270, %v2121, %v2123
      %v2294 = vsel %vm2270, %v2123, %v2125
      %v2295 = vsel %vm2270, %v2127, %v2129
      %v2296 = vsel %vm2270, %v2129, %v2131
      %v2297 = vsel %vm2270, %v2133, %v2135
      %v2298 = vsel %vm2270, %v2135, %v2137
      %v2299 = vsel %vm2270, %v2139, %v2141
      %v2300 = vsel %vm2270, %v2141, %v2143
      %v2301 = vsel %vm2270, %v2145, %v2147
      %v2302 = vsel %vm2270, %v2147, %v2149
      %v2303 = vsel %vm2270, %v2151, %v2153
      %v2304 = vsel %vm2270, %v2153, %v2155
      %v2305 = vsel %vm2270, %v2157, %v2159
      %v2306 = vsel %vm2270, %v2159, %v2161
      %v2307 = vsel %vm2270, %v2163, %v2165
      %v2308 = vsel %vm2270, %v2165, %v2167
      %v2309 = vsel %vm2270, %v2169, %v2171
      %v2310 = vsel %vm2270, %v2171, %v2173
      %v2311 = vsel %vm2270, %v2175, %v2177
      %v2312 = vsel %vm2270, %v2177, %v2179
      %v2313 = vsel %vm2270, %v2181, %v2183
      %v2314 = vsel %vm2270, %v2183, %v2185
      %v2315 = vsel %vm2270, %v2187, %v2189
      %v2316 = vsel %vm2270, %v2189, %v2191
      %v2317 = vsel %vm2270, %v2193, %v2195
      %v2318 = vsel %vm2270, %v2195, %v2197
      %v2319 = vsel %vm2270, %v2199, %v2201
      %v2320 = vsel %vm2270, %v2201, %v2203
      %v2321 = vsel %vm2270, %v2205, %v2207
      %v2322 = vsel %vm2270, %v2207, %v2209
      %v2323 = vsel %vm2270, %v2211, %v2213
      %v2324 = vsel %vm2270, %v2213, %v2215
      %v2325 = vsel %vm2270, %v2217, %v2219
      %v2326 = vsel %vm2270, %v2219, %v2221
      %v2327 = vsel %vm2270, %v2223, %v2225
      %v2328 = vsel %vm2270, %v2225, %v2227
      %v2329 = vsel %vm2270, %v2229, %v2231
      %v2330 = vsel %vm2270, %v2231, %v2233
      %v2331 = vsel %vm2270, %v2235, %v2237
      %v2332 = vsel %vm2270, %v2237, %v2239
      %v2333 = vsel %vm2270, %v2241, %v2243
      %v2334 = vsel %vm2270, %v2243, %v2245
      %v2335 = vsel %vm2270, %v2247, %v2249
      %v2336 = vsel %vm2270, %v2249, %v2251
      %v2337 = vsel %vm2270, %v2253, %v2255
      %v2338 = vsel %vm2270, %v2255, %v2257
      %v2339 = vsel %vm2270, %v2259, %v2261
      %v2340 = vsel %vm2270, %v2261, %v2263
      %v2341 = vsel %vm2270, %v2265, %v2267
      %v2342 = vsel %vm2270, %v2267, %v2269
      %v2416 = vsel %vm387, %v2041, 0
      %2418 = vmatprep.subr.mxu0 %v2272
      %2419 = vmatpush1.msra.mxu0 %v2271
      %2420 = vmatprep.subr.mxu0 %v2274
      %2421 = vmatpush1.msra.mxu0 %v2273
      %2422 = vmatprep.subr.mxu0 %v2276
      %2423 = vmatpush1.msra.mxu0 %v2275
      %2424 = vmatprep.subr.mxu0 %v2278
      %2425 = vmatpush1.msra.mxu0 %v2277
      %2426 = vmatprep.subr.mxu0 %v2280
      %2427 = vmatpush1.msra.mxu0 %v2279
      %2428 = vmatprep.subr.mxu0 %v2282
      %2429 = vmatpush1.msra.mxu0 %v2281
      %2430 = vmatprep.subr.mxu0 %v2284
      %2431 = vmatpush1.msra.mxu0 %v2283
      %2432 = vmatprep.subr.mxu0 %v2286
      %2433 = vmatpush1.msra.mxu0 %v2285
      %2434 = vmatprep.subr.mxu0 %v2288
      %2435 = vmatpush1.msra.mxu0 %v2287
      %2436 = vmatprep.subr.mxu0 %v2290
      %2437 = vmatpush1.msra.mxu0 %v2289
      %2438 = vmatprep.subr.mxu0 %v2292
      %2439 = vmatpush1.msra.mxu0 %v2291
      %2440 = vmatprep.subr.mxu0 %v2294
      %2441 = vmatpush1.msra.mxu0 %v2293
      %2442 = vmatprep.subr.mxu0 %v2296
      %2443 = vmatpush1.msra.mxu0 %v2295
      %2444 = vmatprep.subr.mxu0 %v2298
      %2445 = vmatpush1.msra.mxu0 %v2297
      %2446 = vmatprep.subr.mxu0 %v2300
      %2447 = vmatpush1.msra.mxu0 %v2299
      %2448 = vmatprep.subr.mxu0 %v2302
      %2449 = vmatpush1.msra.mxu0 %v2301
      %2450 = vmatprep.subr.mxu0 %v2304
      %2451 = vmatpush1.msra.mxu0 %v2303
      %2452 = vmatprep.subr.mxu0 %v2306
      %2453 = vmatpush1.msra.mxu0 %v2305
      %2454 = vmatprep.subr.mxu0 %v2308
      %2455 = vmatpush1.msra.mxu0 %v2307
      %2456 = vmatprep.subr.mxu0 %v2310
      %2457 = vmatpush1.msra.mxu0 %v2309
      %2458 = vmatprep.subr.mxu0 %v2312
      %2459 = vmatpush1.msra.mxu0 %v2311
      %2460 = vmatprep.subr.mxu0 %v2314
      %2461 = vmatpush1.msra.mxu0 %v2313
      %2462 = vmatprep.subr.mxu0 %v2316
      %2463 = vmatpush1.msra.mxu0 %v2315
      %2464 = vmatprep.subr.mxu0 %v2318
      %2465 = vmatpush1.msra.mxu0 %v2317
      %2466 = vmatprep.subr.mxu0 %v2320
      %2467 = vmatpush1.msra.mxu0 %v2319
      %2468 = vmatprep.subr.mxu0 %v2322
      %2469 = vmatpush1.msra.mxu0 %v2321
      %2470 = vmatprep.subr.mxu0 %v2324
      %2471 = vmatpush1.msra.mxu0 %v2323
      %2472 = vmatprep.subr.mxu0 %v2326
      %2473 = vmatpush1.msra.mxu0 %v2325
      %2474 = vmatprep.subr.mxu0 %v2328
      %2475 = vmatpush1.msra.mxu0 %v2327
      %2476 = vmatprep.subr.mxu0 %v2330
      %2477 = vmatpush1.msra.mxu0 %v2329
      %2478 = vmatprep.subr.mxu0 %v2332
      %2479 = vmatpush1.msra.mxu0 %v2331
      %2480 = vmatprep.subr.mxu0 %v2334
      %2481 = vmatpush1.msra.mxu0 %v2333
      %2482 = vmatprep.mubr.f32.mxu0 %v2040
      %2483 = vmatmul.mubr.f32.gmra.mrb[0].mxu0 %v2039
      %v2484 = vpop.f32.mrb[0].mxu0
      %v2485 = vadd.f32 0.0, %v2484
      %v2486 = vpop.f32.mrb[0].mxu0
      %v2487 = vadd.f32 0.0, %v2486
      %2488 = vdwg.mxu0
      %2489 = vmatprep.subr.mxu0 %v2336
      %2490 = vmatpush1.msra.mxu0 %v2335
      %2491 = vmatprep.subr.mxu0 %v2338
      %2492 = vmatpush1.msra.mxu0 %v2337
      %2493 = vmatprep.subr.mxu0 %v2340
      %2494 = vmatpush1.msra.mxu0 %v2339
      %2495 = vmatprep.subr.mxu0 %v2342
      %2496 = vmatpush1.msra.mxu0 %v2341
      %2497 = vmatprep.subr.mxu0 0.0
      %2498 = vmatpush1.msra.mxu0 0.0
      %2499 = vmatprep.subr.mxu0 0.0
      %2500 = vmatpush1.msra.mxu0 0.0
      %2501 = vmatprep.subr.mxu0 0.0
      %2502 = vmatpush1.msra.mxu0 0.0
      %2503 = vmatprep.subr.mxu0 0.0
      %2504 = vmatpush1.msra.mxu0 0.0
      %2505 = vmatprep.subr.mxu0 0.0
      %2506 = vmatpush1.msra.mxu0 0.0
      %2507 = vmatprep.subr.mxu0 0.0
      %2508 = vmatpush1.msra.mxu0 0.0
      %2509 = vmatprep.subr.mxu0 0.0
      %2510 = vmatpush1.msra.mxu0 0.0
      %2511 = vmatprep.subr.mxu0 0.0
      %2512 = vmatpush1.msra.mxu0 0.0
      %2513 = vmatprep.subr.mxu0 0.0
      %2514 = vmatpush1.msra.mxu0 0.0
      %2515 = vmatprep.subr.mxu0 0.0
      %2516 = vmatpush1.msra.mxu0 0.0
      %2517 = vmatprep.subr.mxu0 0.0
      %2518 = vmatpush1.msra.mxu0 0.0
      %2519 = vmatprep.subr.mxu0 0.0
      %2520 = vmatpush1.msra.mxu0 0.0
      %2521 = vmatprep.subr.mxu0 0.0
      %2522 = vmatpush1.msra.mxu0 0.0
      %2523 = vmatprep.subr.mxu0 0.0
      %2524 = vmatpush1.msra.mxu0 0.0
      %2525 = vmatprep.subr.mxu0 0.0
      %2526 = vmatpush1.msra.mxu0 0.0
      %2527 = vmatprep.subr.mxu0 0.0
      %2528 = vmatpush1.msra.mxu0 0.0
      %2529 = vmatprep.subr.mxu0 0.0
      %2530 = vmatpush1.msra.mxu0 0.0
      %2531 = vmatprep.subr.mxu0 0.0
      %2532 = vmatpush1.msra.mxu0 0.0
      %2533 = vmatprep.subr.mxu0 0.0
      %2534 = vmatpush1.msra.mxu0 0.0
      %2535 = vmatprep.subr.mxu0 0.0
      %2536 = vmatpush1.msra.mxu0 0.0
      %2537 = vmatprep.subr.mxu0 0.0
      %2538 = vmatpush1.msra.mxu0 0.0
      %2539 = vmatprep.subr.mxu0 0.0
      %2540 = vmatpush1.msra.mxu0 0.0
      %2541 = vmatprep.subr.mxu0 0.0
      %2542 = vmatpush1.msra.mxu0 0.0
      %2543 = vmatprep.subr.mxu0 0.0
      %2544 = vmatpush1.msra.mxu0 0.0
      %2545 = vmatprep.subr.mxu0 0.0
      %2546 = vmatpush1.msra.mxu0 0.0
      %2547 = vmatprep.subr.mxu0 0.0
      %2548 = vmatpush1.msra.mxu0 0.0
      %2549 = vmatprep.subr.mxu0 0.0
      %2550 = vmatpush1.msra.mxu0 0.0
      %2551 = vmatprep.subr.mxu0 0.0
      %2552 = vmatpush1.msra.mxu0 0.0
      %2553 = vmatprep.mubr.f32.mxu0 0.0
      %2554 = vmatmul.mubr.f32.gmra.mrb[0].mxu0 %v2416
      %v2555 = vpop.f32.mrb[0].mxu0
      %v2556 = vadd.f32 %v2485, %v2555
      %v2557 = vpop.f32.mrb[0].mxu0
      %v2558 = vadd.f32 %v2487, %v2557
      %2559 = vdwg.mxu0
      %2560 = vst [vmem:[%s386] sm:$0xff] %v2556
      %2561 = vst [vmem:[%s386 + $0x8] sm:$0xff] %v2558
      %p2562 = scmp.lt.s32.totalorder %s22, 1
      %s2563 = scalar_select %p2562, %s22, 1
      %s2564 = smul.addr %s2563, 2
      %s2565 = smul.addr %s2564, 8
      %s2566 = scalar_lea.vmem %s11, %s2565
      // Predicated region
      $region65: #{se_dense_layer_forward.1} parent=63 // pred_check
        %p2567 = pneg %p276
      $region66: #{se_dense_layer_forward.1} parent=63 // pred_check_branch
        %2569 = sbr.rel (%p2567) target = $region68
      $region67: #{se_dense_layer_forward.1} parent=63 // pred_region
        _
      $region68: #{se_dense_layer_forward.1} parent=63 // pred_fallthru
        _
    $region64: #{se_dense_layer_forward.1} parent=5 // pred_fallthru
      _
    %p2570 = scmp.le.s32.totalorder 2, %s17
    // Predicated region
    $region69: #{se_dense_layer_forward.1} parent=5 // pred_check
      %p2571 = pneg %p2570
    $region70: #{se_dense_layer_forward.1} parent=5 // pred_check_branch
      %2573 = sbr.rel (%p2571) target = $region72
    $region71: #{se_dense_layer_forward.1} parent=5 // pred_region
      %s2574 = ssub.s32 %s17, 2
      // Predicated region
      $region73: #{se_dense_layer_forward.1} parent=71 // pred_check
        %p2575 = pneg %p282
      $region74: #{se_dense_layer_forward.1} parent=71 // pred_check_branch
        %2577 = sbr.rel (%p2575) target = $region76
      $region75: #{se_dense_layer_forward.1} parent=71 // pred_region
        %p2578 = scmp.lt.s32.totalorder %s23, 1
        %s2579 = scalar_select %p2578, %s23, 1
        %s2580 = smul.addr %s2579, 2
        %s2581 = smul.addr %s2580, 8
        %s2582 = scalar_lea.vmem %s11, %s2581
      $region76: #{se_dense_layer_forward.1} parent=71 // pred_fallthru
        _
    $region72: #{se_dense_layer_forward.1} parent=5 // pred_fallthru
      _
  $region6: #{se_dense_layer_forward.1} parent=0 // loop_footer
    %s21 = sadd.s32 1, %s17
  $region7: #{se_dense_layer_forward.1} parent=0 // loop_footer_branch
    %16 = sbr.rel target = $region3
  $region8: #{se_dense_layer_forward.1} parent=0 // loop_exit
    _

</llo_original>
